<compile_context>
chip_gen: v7x
topology: tpu7x:2x2x1
jax: 0.10.0
libtpu: 0.0.40
codegen_flags: <defaults>
</compile_context>

<pallas_src>
import numpy as np
import jax
import jax.numpy as jnp
from jax import lax
from jax.experimental import pallas as pl
from jax.experimental.pallas import tpu as pltpu

MXU_DTYPE = jnp.bfloat16        # MXU operand dtype (accumulation stays f32)
_VMEM_LIMIT = 32 * 1024 * 1024  # safe on v5e/v6e (128 MiB) and v7x (64 MiB)


# ------------------------------ Pallas kernel --------------------------------

def _make_network_block_kernel(kcfgs):
    """Fully fused NetworkBlock forward for one image (one grid step).

    kcfgs: static per-layer config dicts with keys
      ci, co, h, w, ho, wo, stride, project.
    Ref layout: (x, *per-layer params) inputs, 1 output, 2 scratches per layer.
    """
    n_in = 1 + sum(6 if c["project"] else 5 for c in kcfgs)

    def kernel(*refs):
        in_refs = refs[:n_in]
        out_ref = refs[n_in]
        scratch = refs[n_in + 1:]

        cur = in_refs[0][0]                      # (H0, W0*C0) f32 image slab
        ri, si = 1, 0
        for c in kcfgs:
            ci, co = c["ci"], c["co"]
            h, w, ho, wo, s = c["h"], c["w"], c["ho"], c["wo"], c["stride"]
            s1_ref, b1_ref, band1_ref, b2_ref, band2_ref = in_refs[ri:ri + 5]
            ws_ref = in_refs[ri + 5] if c["project"] else None
            ri += 6 if c["project"] else 5
            apad, bpad = scratch[si], scratch[si + 1]
            si += 2

            # --- BN1 + ReLU (fused, f32), written into the H-zero-padded slab.
            #     Pad rows are written as exact zeros, so no in-kernel masking
            #     is needed; W-padding is folded into the banded weights.
            a = jnp.maximum(cur * s1_ref[...] + b1_ref[...], 0.0)
            zrow_a = jnp.zeros((1, w * ci), jnp.float32)
            apad[pl.ds(0, 1), :] = zrow_a
            apad[pl.ds(h + 1, 1), :] = zrow_a
            apad[pl.ds(1, h), :] = a

            # --- conv1: 3 banded MXU matmuls (kx taps / W-stride / W-pad and
            #     the BN2 scale live in the weights; H-stride folded into the
            #     row taps). bf16 operands, f32 accumulation.
            acc1 = None
            a_mid16 = None
            if s == 1:
                afull16 = apad[...].astype(MXU_DTYPE)   # cast once (contiguous)
            for ky in range(3):
                if s == 1:
                    tap = afull16[ky:ky + ho, :]
                else:
                    tap = apad[pl.ds(ky, ho, stride=s), :].astype(MXU_DTYPE)
                if ky == 1:
                    a_mid16 = tap   # rows also needed by the 1x1 shortcut conv
                d = jnp.dot(tap, band1_ref[ky],
                            preferred_element_type=jnp.float32)
                acc1 = d if acc1 is None else acc1 + d

            # --- BN2 (shift only; scale pre-folded) + ReLU.
            b = jnp.maximum(acc1 + b2_ref[...], 0.0)
            # TODO(synk): F.dropout(p=drop_rate) is identity in eval mode; skipped.

            # --- conv2 (stride 1): 3 banded MXU matmuls over H-padded b.
            zrow_b = jnp.zeros((1, wo * co), jnp.float32)
            bpad[pl.ds(0, 1), :] = zrow_b
            bpad[pl.ds(ho + 1, 1), :] = zrow_b
            bpad[pl.ds(1, ho), :] = b
            bfull16 = bpad[...].astype(MXU_DTYPE)       # cast once (contiguous)
            acc2 = None
            for ky in range(3):
                d = jnp.dot(bfull16[ky:ky + ho, :], band2_ref[ky],
                            preferred_element_type=jnp.float32)
                acc2 = d if acc2 is None else acc2 + d

            # --- residual: identity, or fused 1x1 strided projection of
            #     relu(bn1(x)) reusing the ky=1 conv tap already in registers.
            if c["project"]:
                sc = jnp.dot(a_mid16, ws_ref[...],
                             preferred_element_type=jnp.float32)
            else:
                sc = cur
            cur = acc2 + sc           # stays in VMEM/vregs for the next layer

        out_ref[0] = cur.astype(out_ref.dtype)

    return kernel


# ------------------------------ Wrapper glue ----------------------------------

def _bn_fold(gamma, beta, mean, var, eps=1e-5):
    scale = gamma / jnp.sqrt(var + eps)
    return scale, beta - mean * scale


def _tile_channels(v, reps):
    # per-channel vector -> (1, reps*C) row matching the (w, c)-flattened lanes
    return jnp.tile(v, reps).reshape(1, reps * v.shape[0])


def _banded_conv3x3(w_hwio, w, wo, stride):
    """(3,3,Ci,Co) HWIO -> (3, W*Ci, Wo*Co) per-ky banded matrices (f32).

    Each ky matrix is applied to one H-shifted row slab of the *unpadded-W*
    activation; kx taps and the W-stride live in the band structure, and kx
    taps that fall on the W zero-padding are simply dropped (they multiply 0).
    """
    kh, kw, ci, co = w_hwio.shape
    sel = np.zeros((kw, w, wo), np.float32)
    for kx in range(kw):
        for o in range(wo):
            ip = o * stride + kx - 1          # unpadded input column
            if 0 <= ip < w:
                sel[kx, ip, o] = 1.0
    band = jnp.einsum("yxio,xpw->ypiwo", w_hwio, jnp.asarray(sel))
    return band.reshape(kh, w * ci, wo * co)


def _banded_shortcut(ws_hwio, w, wo, stride):
    """(1,1,Ci,Co) -> (W*Ci, Wo*Co) banded 1x1-strided-conv matrix acting on
    the unpadded-W activation rows (output pixel o reads input pixel o*stride)."""
    ci, co = ws_hwio.shape[-2], ws_hwio.shape[-1]
    sel = np.zeros((w, wo), np.float32)
    for o in range(wo):
        sel[o * stride, o] = 1.0
    band = jnp.einsum("io,pw->piwo", ws_hwio.reshape(ci, co), jnp.asarray(sel))
    return band.reshape(w * ci, wo * co)


def _cost(flops, *arrays):
    nbytes = sum(int(np.prod(a.shape)) * np.dtype(a.dtype).itemsize
                 for a in arrays)
    return pl.CostEstimate(flops=int(flops), transcendentals=0,
                           bytes_accessed=int(nbytes))


def network_block_forward(x, layer_params, layer_cfgs):
    """x: (N, H, W, C0) NHWC -> fused NetworkBlock forward, one pallas_call."""
    N, H, W, C0 = x.shape

    inputs = [x.reshape(N, H, W * C0)]
    in_specs = [pl.BlockSpec((1, H, W * C0), lambda n: (n, 0, 0))]
    scratch_shapes = []
    kcfgs = []
    flops = 0
    h, w, ci = H, W, C0

    for p, (cin_i, co, stride, equal) in zip(layer_params, layer_cfgs):
        assert cin_i == ci
        project = not equal
        if equal:
            assert stride == 1 and cin_i == co, "identity shortcut needs matching shapes"
        ho = (h - 1) // stride + 1
        wo = (w - 1) // stride + 1

        s1, b1 = _bn_fold(p["bn1_gamma"], p["bn1_beta"], p["bn1_mean"], p["bn1_var"])
        s2, b2 = _bn_fold(p["bn2_gamma"], p["bn2_beta"], p["bn2_mean"], p["bn2_var"])

        # BN2 scale folded into the conv1 banded weights at trace time (f32),
        # then cast to the bf16 MXU operand dtype.
        band1 = (_banded_conv3x3(p["w1"], w, wo, stride)
                 * _tile_channels(s2, wo)).astype(MXU_DTYPE)
        band2 = _banded_conv3x3(p["w2"], wo, wo, 1).astype(MXU_DTYPE)

        inputs += [_tile_channels(s1, w), _tile_channels(b1, w), band1,
                   _tile_channels(b2, wo), band2]
        in_specs += [
            pl.BlockSpec((1, w * ci), lambda n: (0, 0)),
            pl.BlockSpec((1, w * ci), lambda n: (0, 0)),
            pl.BlockSpec((3, w * ci, wo * co), lambda n: (0, 0, 0)),
            pl.BlockSpec((1, wo * co), lambda n: (0, 0)),
            pl.BlockSpec((3, wo * co, wo * co), lambda n: (0, 0, 0)),
        ]
        if project:
            inputs.append(_banded_shortcut(p["ws"], w, wo, stride).astype(MXU_DTYPE))
            in_specs.append(pl.BlockSpec((w * ci, wo * co), lambda n: (0, 0)))

        scratch_shapes += [pltpu.VMEM((h + 2, w * ci), jnp.float32),
                           pltpu.VMEM((ho + 2, wo * co), jnp.float32)]
        kcfgs.append(dict(ci=ci, co=co, h=h, w=w, ho=ho, wo=wo,
                          stride=stride, project=project))

        flops += 2 * ho * (w * ci) * (wo * co) * (3 + (1 if project else 0))
        flops += 2 * ho * (wo * co) * (wo * co) * 3
        h, w, ci = ho, wo, co

    out_sds = jax.ShapeDtypeStruct((N, h, w * ci), jnp.float32)
    out = pl.pallas_call(
        _make_network_block_kernel(kcfgs),
        grid=(N,),
        in_specs=in_specs,
        out_specs=pl.BlockSpec((1, h, w * ci), lambda n: (n, 0, 0)),
        out_shape=out_sds,
        scratch_shapes=scratch_shapes,
        compiler_params=pltpu.CompilerParams(
            dimension_semantics=("parallel",),      # megacore sharding on v7x
            vmem_limit_bytes=_VMEM_LIMIT),
        cost_estimate=_cost(N * flops, *inputs, out_sds),
    )(*inputs)
    return out.reshape(N, h, w, ci)


# --------------------------- Pure-JAX reference --------------------------------

def basic_block_ref(x, p, stride, equal_in_out):
    dn = ("NHWC", "HWIO", "NHWC")
    s1, b1 = _bn_fold(p["bn1_gamma"], p["bn1_beta"], p["bn1_mean"], p["bn1_var"])
    a = jnp.maximum(x * s1 + b1, 0.0)
    h1 = lax.conv_general_dilated(a, p["w1"], (stride, stride),
                                  ((1, 1), (1, 1)), dimension_numbers=dn)
    s2, b2 = _bn_fold(p["bn2_gamma"], p["bn2_beta"], p["bn2_mean"], p["bn2_var"])
    bpre = jnp.maximum(h1 * s2 + b2, 0.0)
    h2 = lax.conv_general_dilated(bpre, p["w2"], (1, 1),
                                  ((1, 1), (1, 1)), dimension_numbers=dn)
    if equal_in_out:
        sc = x
    else:
        sc = lax.conv_general_dilated(a, p["ws"], (stride, stride),
                                      ((0, 0), (0, 0)), dimension_numbers=dn)
    return sc + h2


def network_block_ref(x, layer_params, layer_cfgs):
    for p, (_, _, stride, equal) in zip(layer_params, layer_cfgs):
        x = basic_block_ref(x, p, stride, equal)
    return x


# ------------------------------ Param init -------------------------------------

def make_block_params(key, cin, cout, equal_in_out):
    ks = jax.random.split(key, 11)
    f32 = jnp.float32
    p = {
        "bn1_gamma": 1.0 + 0.1 * jax.random.normal(ks[0], (cin,), f32),
        "bn1_beta":  0.1 * jax.random.normal(ks[1], (cin,), f32),
        "bn1_mean":  0.1 * jax.random.normal(ks[2], (cin,), f32),
        "bn1_var":   jax.random.uniform(ks[3], (cin,), f32, 0.5, 1.5),
        "w1": jax.random.normal(ks[4], (3, 3, cin, cout), f32) / jnp.sqrt(9.0 * cin),
        "bn2_gamma": 1.0 + 0.1 * jax.random.normal(ks[5], (cout,), f32),
        "bn2_beta":  0.1 * jax.random.normal(ks[6], (cout,), f32),
        "bn2_mean":  0.1 * jax.random.normal(ks[7], (cout,), f32),
        "bn2_var":   jax.random.uniform(ks[8], (cout,), f32, 0.5, 1.5),
        "w2": jax.random.normal(ks[9], (3, 3, cout, cout), f32) / jnp.sqrt(9.0 * cout),
    }
    if not equal_in_out:
        p["ws"] = jax.random.normal(ks[10], (1, 1, cin, cout), f32) / jnp.sqrt(float(cin))
    return p


# --------------------------------- Main -----------------------------------------

if __name__ == "__main__":
    key = jax.random.PRNGKey(0)

    # NetworkBlock(nb_layers=2, in_planes=4, out_planes=8, block=BasicBlock,
    #              stride=2, drop_rate=0.3)
    N, IN_PLANES, H, W = 2, 4, 16, 16
    NB_LAYERS, OUT_PLANES, STRIDE = 2, 8, 2

    # per-layer config: (cin, cout, stride, equal_in_out) -- same selection
    # logic as NetworkBlock._make_layer
    layer_cfgs = []
    for i in range(NB_LAYERS):
        cin_i = IN_PLANES if i == 0 else OUT_PLANES
        stride_i = STRIDE if i == 0 else 1
        layer_cfgs.append((cin_i, OUT_PLANES, stride_i, cin_i == OUT_PLANES))

    key, kx = jax.random.split(key)
    layer_params = []
    for cin_i, cout_i, _, equal_i in layer_cfgs:
        key, kp = jax.random.split(key)
        layer_params.append(make_block_params(kp, cin_i, cout_i, equal_i))

    # Input follows the PyTorch NCHW convention; the kernel works in NHWC.
    x_nchw = jax.random.normal(kx, (N, IN_PLANES, H, W), jnp.float32)
    x_nhwc = jnp.transpose(x_nchw, (0, 2, 3, 1))

    # Params are closure-captured so banding / BN folding constant-folds at
    # compile time: the runtime graph is (reshape, one pallas_call, reshape).
    fwd = jax.jit(lambda xx: network_block_forward(xx, layer_params, layer_cfgs))
    out_nhwc = jax.block_until_ready(fwd(x_nhwc))

    # Correctness check against a pure-JAX f32 reference (XLA conv).
    ref_nhwc = network_block_ref(x_nhwc, layer_params, layer_cfgs)
    assert out_nhwc.shape == ref_nhwc.shape == (N, H // STRIDE, W // STRIDE, OUT_PLANES)
    max_err = float(jnp.max(jnp.abs(out_nhwc - ref_nhwc)))
    # bf16 MXU operands with f32 accumulation -> ~0.5% relative error budget.
    assert jnp.allclose(out_nhwc, ref_nhwc, atol=2e-2, rtol=2e-2), max_err

    # back to PyTorch NCHW output convention
    out_nchw = jnp.transpose(out_nhwc, (0, 3, 1, 2))
    jax.block_until_ready(out_nchw)

    print("KERNEL_OK")
</pallas_src>

<mosaic_0001>
module attributes {stable_mosaic.version = 11 : i64} {
  func.func @kernel(%arg0: i32, %arg1: memref<1x16x64xf32, #tpu.memory_space<vmem>>, %arg2: memref<1x64xf32, #tpu.memory_space<vmem>>, %arg3: memref<1x64xf32, #tpu.memory_space<vmem>>, %arg4: memref<3x64x64xbf16, #tpu.memory_space<vmem>>, %arg5: memref<1x64xf32, #tpu.memory_space<vmem>>, %arg6: memref<3x64x64xbf16, #tpu.memory_space<vmem>>, %arg7: memref<64x64xbf16, #tpu.memory_space<vmem>>, %arg8: memref<1x64xf32, #tpu.memory_space<vmem>>, %arg9: memref<1x64xf32, #tpu.memory_space<vmem>>, %arg10: memref<3x64x64xbf16, #tpu.memory_space<vmem>>, %arg11: memref<1x64xf32, #tpu.memory_space<vmem>>, %arg12: memref<3x64x64xbf16, #tpu.memory_space<vmem>>, %arg13: memref<1x8x64xf32, #tpu.memory_space<vmem>>, %arg14: memref<18x64xf32, #tpu.memory_space<vmem>>, %arg15: memref<10x64xf32, #tpu.memory_space<vmem>>, %arg16: memref<10x64xf32, #tpu.memory_space<vmem>>, %arg17: memref<10x64xf32, #tpu.memory_space<vmem>>) attributes {dimension_semantics = [#tpu.dimension_semantics<parallel>], iteration_bounds = array<i64: 2>, scalar_prefetch = 0 : i64, scratch_operands = 4 : i64, tpu.core_type = #tpu.core_type<tc>, window_params = [{transform_indices = @transform_0, window_bounds = array<i64: 1, 16, 64>}, {pipeline_mode = #tpu.pipeline_mode<synchronous>, transform_indices = @transform_1, window_bounds = array<i64: 1, 64>}, {pipeline_mode = #tpu.pipeline_mode<synchronous>, transform_indices = @transform_2, window_bounds = array<i64: 1, 64>}, {pipeline_mode = #tpu.pipeline_mode<synchronous>, transform_indices = @transform_3, window_bounds = array<i64: 3, 64, 64>}, {pipeline_mode = #tpu.pipeline_mode<synchronous>, transform_indices = @transform_4, window_bounds = array<i64: 1, 64>}, {pipeline_mode = #tpu.pipeline_mode<synchronous>, transform_indices = @transform_5, window_bounds = array<i64: 3, 64, 64>}, {pipeline_mode = #tpu.pipeline_mode<synchronous>, transform_indices = @transform_6, window_bounds = array<i64: 64, 64>}, {pipeline_mode = #tpu.pipeline_mode<synchronous>, transform_indices = @transform_7, window_bounds = array<i64: 1, 64>}, {pipeline_mode = #tpu.pipeline_mode<synchronous>, transform_indices = @transform_8, window_bounds = array<i64: 1, 64>}, {pipeline_mode = #tpu.pipeline_mode<synchronous>, transform_indices = @transform_9, window_bounds = array<i64: 3, 64, 64>}, {pipeline_mode = #tpu.pipeline_mode<synchronous>, transform_indices = @transform_10, window_bounds = array<i64: 1, 64>}, {pipeline_mode = #tpu.pipeline_mode<synchronous>, transform_indices = @transform_11, window_bounds = array<i64: 3, 64, 64>}, {transform_indices = @transform_12, window_bounds = array<i64: 1, 8, 64>}]} {
    %c0 = arith.constant 0 : index
    %c0_0 = arith.constant 0 : index
    %c0_1 = arith.constant 0 : index
    %0 = vector.load %arg1[%c0, %c0_0, %c0_1] : memref<1x16x64xf32, #tpu.memory_space<vmem>>, vector<1x16x64xf32>
    %1 = vector.shape_cast %0 : vector<1x16x64xf32> to vector<16x64xf32>
    %c0_2 = arith.constant 0 : index
    %c0_3 = arith.constant 0 : index
    %2 = vector.load %arg2[%c0_2, %c0_3] : memref<1x64xf32, #tpu.memory_space<vmem>>, vector<1x64xf32>
    %3 = vector.broadcast %2 : vector<1x64xf32> to vector<16x64xf32>
    %4 = arith.mulf %1, %3 : vector<16x64xf32>
    %c0_4 = arith.constant 0 : index
    %c0_5 = arith.constant 0 : index
    %5 = vector.load %arg3[%c0_4, %c0_5] : memref<1x64xf32, #tpu.memory_space<vmem>>, vector<1x64xf32>
    %6 = vector.broadcast %5 : vector<1x64xf32> to vector<16x64xf32>
    %7 = arith.addf %4, %6 : vector<16x64xf32>
    %cst = arith.constant 0.000000e+00 : f32
    %8 = vector.broadcast %cst : f32 to vector<16x64xf32>
    %9 = arith.maximumf %7, %8 : vector<16x64xf32>
    %cst_6 = arith.constant 0.000000e+00 : f32
    %10 = vector.broadcast %cst_6 : f32 to vector<1x64xf32>
    %c0_7 = arith.constant 0 : index
    %c0_8 = arith.constant 0 : index
    %11 = vector.load %arg14[%c0_7, %c0_8] : memref<18x64xf32, #tpu.memory_space<vmem>>, vector<1x64xf32>
    tpu.vector_store %arg14[%c0_7, %c0_8], %10 {strides = array<i32>} : memref<18x64xf32, #tpu.memory_space<vmem>>, vector<1x64xf32>,
    %c17 = arith.constant 17 : index
    %c0_9 = arith.constant 0 : index
    %12 = vector.load %arg14[%c17, %c0_9] : memref<18x64xf32, #tpu.memory_space<vmem>>, vector<1x64xf32>
    tpu.vector_store %arg14[%c17, %c0_9], %10 {strides = array<i32>} : memref<18x64xf32, #tpu.memory_space<vmem>>, vector<1x64xf32>,
    %c1 = arith.constant 1 : index
    %c0_10 = arith.constant 0 : index
    %13 = vector.load %arg14[%c1, %c0_10] : memref<18x64xf32, #tpu.memory_space<vmem>>, vector<16x64xf32>
    tpu.vector_store %arg14[%c1, %c0_10], %9 {strides = array<i32>} : memref<18x64xf32, #tpu.memory_space<vmem>>, vector<16x64xf32>,
    %c0_11 = arith.constant 0 : index
    %c0_12 = arith.constant 0 : index
    %14 = tpu.strided_load %arg14[%c0_11, %c0_12] {strides = array<i32: 2, 1>} : memref<18x64xf32, #tpu.memory_space<vmem>>, vector<8x64xf32>
    %15 = arith.truncf %14 : vector<8x64xf32> to vector<8x64xbf16>
    %c0_13 = arith.constant 0 : index
    %c0_14 = arith.constant 0 : index
    %c0_15 = arith.constant 0 : index
    %16 = vector.load %arg4[%c0_13, %c0_14, %c0_15] : memref<3x64x64xbf16, #tpu.memory_space<vmem>>, vector<1x64x64xbf16>
    %17 = vector.shape_cast %16 : vector<1x64x64xbf16> to vector<64x64xbf16>
    %cst_16 = arith.constant dense<0.000000e+00> : vector<8x64xf32>
    %18 = tpu.matmul %15, %17, %cst_16 {dimension_numbers = #tpu.dot_dimension_numbers<[1], [0], [0], [1], [0, 0, 1, 1], [], []>} : vector<8x64xbf16>, vector<64x64xbf16>, vector<8x64xf32> -> vector<8x64xf32>
    %c1_17 = arith.constant 1 : index
    %c0_18 = arith.constant 0 : index
    %19 = tpu.strided_load %arg14[%c1_17, %c0_18] {strides = array<i32: 2, 1>} : memref<18x64xf32, #tpu.memory_space<vmem>>, vector<8x64xf32>
    %20 = arith.truncf %19 : vector<8x64xf32> to vector<8x64xbf16>
    %c1_19 = arith.constant 1 : index
    %c0_20 = arith.constant 0 : index
    %c0_21 = arith.constant 0 : index
    %21 = vector.load %arg4[%c1_19, %c0_20, %c0_21] : memref<3x64x64xbf16, #tpu.memory_space<vmem>>, vector<1x64x64xbf16>
    %22 = vector.shape_cast %21 : vector<1x64x64xbf16> to vector<64x64xbf16>
    %cst_22 = arith.constant dense<0.000000e+00> : vector<8x64xf32>
    %23 = tpu.matmul %20, %22, %cst_22 {dimension_numbers = #tpu.dot_dimension_numbers<[1], [0], [0], [1], [0, 0, 1, 1], [], []>} : vector<8x64xbf16>, vector<64x64xbf16>, vector<8x64xf32> -> vector<8x64xf32>
    %24 = arith.addf %18, %23 : vector<8x64xf32>
    %c2 = arith.constant 2 : index
    %c0_23 = arith.constant 0 : index
    %25 = tpu.strided_load %arg14[%c2, %c0_23] {strides = array<i32: 2, 1>} : memref<18x64xf32, #tpu.memory_space<vmem>>, vector<8x64xf32>
    %26 = arith.truncf %25 : vector<8x64xf32> to vector<8x64xbf16>
    %c2_24 = arith.constant 2 : index
    %c0_25 = arith.constant 0 : index
    %c0_26 = arith.constant 0 : index
    %27 = vector.load %arg4[%c2_24, %c0_25, %c0_26] : memref<3x64x64xbf16, #tpu.memory_space<vmem>>, vector<1x64x64xbf16>
    %28 = vector.shape_cast %27 : vector<1x64x64xbf16> to vector<64x64xbf16>
    %cst_27 = arith.constant dense<0.000000e+00> : vector<8x64xf32>
    %29 = tpu.matmul %26, %28, %cst_27 {dimension_numbers = #tpu.dot_dimension_numbers<[1], [0], [0], [1], [0, 0, 1, 1], [], []>} : vector<8x64xbf16>, vector<64x64xbf16>, vector<8x64xf32> -> vector<8x64xf32>
    %30 = arith.addf %24, %29 : vector<8x64xf32>
    %c0_28 = arith.constant 0 : index
    %c0_29 = arith.constant 0 : index
    %31 = vector.load %arg5[%c0_28, %c0_29] : memref<1x64xf32, #tpu.memory_space<vmem>>, vector<1x64xf32>
    %32 = vector.broadcast %31 : vector<1x64xf32> to vector<8x64xf32>
    %33 = arith.addf %30, %32 : vector<8x64xf32>
    %cst_30 = arith.constant 0.000000e+00 : f32
    %34 = vector.broadcast %cst_30 : f32 to vector<8x64xf32>
    %35 = arith.maximumf %33, %34 : vector<8x64xf32>
    %cst_31 = arith.constant 0.000000e+00 : f32
    %36 = vector.broadcast %cst_31 : f32 to vector<1x64xf32>
    %c0_32 = arith.constant 0 : index
    %c0_33 = arith.constant 0 : index
    %37 = vector.load %arg15[%c0_32, %c0_33] : memref<10x64xf32, #tpu.memory_space<vmem>>, vector<1x64xf32>
    tpu.vector_store %arg15[%c0_32, %c0_33], %36 {strides = array<i32>} : memref<10x64xf32, #tpu.memory_space<vmem>>, vector<1x64xf32>,
    %c9 = arith.constant 9 : index
    %c0_34 = arith.constant 0 : index
    %38 = vector.load %arg15[%c9, %c0_34] : memref<10x64xf32, #tpu.memory_space<vmem>>, vector<1x64xf32>
    tpu.vector_store %arg15[%c9, %c0_34], %36 {strides = array<i32>} : memref<10x64xf32, #tpu.memory_space<vmem>>, vector<1x64xf32>,
    %c1_35 = arith.constant 1 : index
    %c0_36 = arith.constant 0 : index
    %39 = vector.load %arg15[%c1_35, %c0_36] : memref<10x64xf32, #tpu.memory_space<vmem>>, vector<8x64xf32>
    tpu.vector_store %arg15[%c1_35, %c0_36], %35 {strides = array<i32>} : memref<10x64xf32, #tpu.memory_space<vmem>>, vector<8x64xf32>,
    %c0_37 = arith.constant 0 : index
    %c0_38 = arith.constant 0 : index
    %40 = vector.load %arg15[%c0_37, %c0_38] : memref<10x64xf32, #tpu.memory_space<vmem>>, vector<10x64xf32>
    %41 = arith.truncf %40 : vector<10x64xf32> to vector<10x64xbf16>
    %42 = vector.extract_strided_slice %41 {offsets = [0, 0], sizes = [8, 64], strides = [1, 1]} : vector<10x64xbf16> to vector<8x64xbf16>
    %c0_39 = arith.constant 0 : index
    %c0_40 = arith.constant 0 : index
    %c0_41 = arith.constant 0 : index
    %43 = vector.load %arg6[%c0_39, %c0_40, %c0_41] : memref<3x64x64xbf16, #tpu.memory_space<vmem>>, vector<1x64x64xbf16>
    %44 = vector.shape_cast %43 : vector<1x64x64xbf16> to vector<64x64xbf16>
    %cst_42 = arith.constant dense<0.000000e+00> : vector<8x64xf32>
    %45 = tpu.matmul %42, %44, %cst_42 {dimension_numbers = #tpu.dot_dimension_numbers<[1], [0], [0], [1], [0, 0, 1, 1], [], []>} : vector<8x64xbf16>, vector<64x64xbf16>, vector<8x64xf32> -> vector<8x64xf32>
    %46 = vector.extract_strided_slice %41 {offsets = [1, 0], sizes = [8, 64], strides = [1, 1]} : vector<10x64xbf16> to vector<8x64xbf16>
    %c1_43 = arith.constant 1 : index
    %c0_44 = arith.constant 0 : index
    %c0_45 = arith.constant 0 : index
    %47 = vector.load %arg6[%c1_43, %c0_44, %c0_45] : memref<3x64x64xbf16, #tpu.memory_space<vmem>>, vector<1x64x64xbf16>
    %48 = vector.shape_cast %47 : vector<1x64x64xbf16> to vector<64x64xbf16>
    %cst_46 = arith.constant dense<0.000000e+00> : vector<8x64xf32>
    %49 = tpu.matmul %46, %48, %cst_46 {dimension_numbers = #tpu.dot_dimension_numbers<[1], [0], [0], [1], [0, 0, 1, 1], [], []>} : vector<8x64xbf16>, vector<64x64xbf16>, vector<8x64xf32> -> vector<8x64xf32>
    %50 = arith.addf %45, %49 : vector<8x64xf32>
    %51 = vector.extract_strided_slice %41 {offsets = [2, 0], sizes = [8, 64], strides = [1, 1]} : vector<10x64xbf16> to vector<8x64xbf16>
    %c2_47 = arith.constant 2 : index
    %c0_48 = arith.constant 0 : index
    %c0_49 = arith.constant 0 : index
    %52 = vector.load %arg6[%c2_47, %c0_48, %c0_49] : memref<3x64x64xbf16, #tpu.memory_space<vmem>>, vector<1x64x64xbf16>
    %53 = vector.shape_cast %52 : vector<1x64x64xbf16> to vector<64x64xbf16>
    %cst_50 = arith.constant dense<0.000000e+00> : vector<8x64xf32>
    %54 = tpu.matmul %51, %53, %cst_50 {dimension_numbers = #tpu.dot_dimension_numbers<[1], [0], [0], [1], [0, 0, 1, 1], [], []>} : vector<8x64xbf16>, vector<64x64xbf16>, vector<8x64xf32> -> vector<8x64xf32>
    %55 = arith.addf %50, %54 : vector<8x64xf32>
    %c0_51 = arith.constant 0 : index
    %c0_52 = arith.constant 0 : index
    %56 = vector.load %arg7[%c0_51, %c0_52] : memref<64x64xbf16, #tpu.memory_space<vmem>>, vector<64x64xbf16>
    %cst_53 = arith.constant dense<0.000000e+00> : vector<8x64xf32>
    %57 = tpu.matmul %20, %56, %cst_53 {dimension_numbers = #tpu.dot_dimension_numbers<[1], [0], [0], [1], [0, 0, 1, 1], [], []>} : vector<8x64xbf16>, vector<64x64xbf16>, vector<8x64xf32> -> vector<8x64xf32>
    %58 = arith.addf %55, %57 : vector<8x64xf32>
    %c0_54 = arith.constant 0 : index
    %c0_55 = arith.constant 0 : index
    %59 = vector.load %arg8[%c0_54, %c0_55] : memref<1x64xf32, #tpu.memory_space<vmem>>, vector<1x64xf32>
    %60 = vector.broadcast %59 : vector<1x64xf32> to vector<8x64xf32>
    %61 = arith.mulf %58, %60 : vector<8x64xf32>
    %c0_56 = arith.constant 0 : index
    %c0_57 = arith.constant 0 : index
    %62 = vector.load %arg9[%c0_56, %c0_57] : memref<1x64xf32, #tpu.memory_space<vmem>>, vector<1x64xf32>
    %63 = vector.broadcast %62 : vector<1x64xf32> to vector<8x64xf32>
    %64 = arith.addf %61, %63 : vector<8x64xf32>
    %cst_58 = arith.constant 0.000000e+00 : f32
    %65 = vector.broadcast %cst_58 : f32 to vector<8x64xf32>
    %66 = arith.maximumf %64, %65 : vector<8x64xf32>
    %cst_59 = arith.constant 0.000000e+00 : f32
    %67 = vector.broadcast %cst_59 : f32 to vector<1x64xf32>
    %c0_60 = arith.constant 0 : index
    %c0_61 = arith.constant 0 : index
    %68 = vector.load %arg16[%c0_60, %c0_61] : memref<10x64xf32, #tpu.memory_space<vmem>>, vector<1x64xf32>
    tpu.vector_store %arg16[%c0_60, %c0_61], %67 {strides = array<i32>} : memref<10x64xf32, #tpu.memory_space<vmem>>, vector<1x64xf32>,
    %c9_62 = arith.constant 9 : index
    %c0_63 = arith.constant 0 : index
    %69 = vector.load %arg16[%c9_62, %c0_63] : memref<10x64xf32, #tpu.memory_space<vmem>>, vector<1x64xf32>
    tpu.vector_store %arg16[%c9_62, %c0_63], %67 {strides = array<i32>} : memref<10x64xf32, #tpu.memory_space<vmem>>, vector<1x64xf32>,
    %c1_64 = arith.constant 1 : index
    %c0_65 = arith.constant 0 : index
    %70 = vector.load %arg16[%c1_64, %c0_65] : memref<10x64xf32, #tpu.memory_space<vmem>>, vector<8x64xf32>
    tpu.vector_store %arg16[%c1_64, %c0_65], %66 {strides = array<i32>} : memref<10x64xf32, #tpu.memory_space<vmem>>, vector<8x64xf32>,
    %c0_66 = arith.constant 0 : index
    %c0_67 = arith.constant 0 : index
    %71 = vector.load %arg16[%c0_66, %c0_67] : memref<10x64xf32, #tpu.memory_space<vmem>>, vector<10x64xf32>
    %72 = arith.truncf %71 : vector<10x64xf32> to vector<10x64xbf16>
    %73 = vector.extract_strided_slice %72 {offsets = [0, 0], sizes = [8, 64], strides = [1, 1]} : vector<10x64xbf16> to vector<8x64xbf16>
    %c0_68 = arith.constant 0 : index
    %c0_69 = arith.constant 0 : index
    %c0_70 = arith.constant 0 : index
    %74 = vector.load %arg10[%c0_68, %c0_69, %c0_70] : memref<3x64x64xbf16, #tpu.memory_space<vmem>>, vector<1x64x64xbf16>
    %75 = vector.shape_cast %74 : vector<1x64x64xbf16> to vector<64x64xbf16>
    %cst_71 = arith.constant dense<0.000000e+00> : vector<8x64xf32>
    %76 = tpu.matmul %73, %75, %cst_71 {dimension_numbers = #tpu.dot_dimension_numbers<[1], [0], [0], [1], [0, 0, 1, 1], [], []>} : vector<8x64xbf16>, vector<64x64xbf16>, vector<8x64xf32> -> vector<8x64xf32>
    %77 = vector.extract_strided_slice %72 {offsets = [1, 0], sizes = [8, 64], strides = [1, 1]} : vector<10x64xbf16> to vector<8x64xbf16>
    %c1_72 = arith.constant 1 : index
    %c0_73 = arith.constant 0 : index
    %c0_74 = arith.constant 0 : index
    %78 = vector.load %arg10[%c1_72, %c0_73, %c0_74] : memref<3x64x64xbf16, #tpu.memory_space<vmem>>, vector<1x64x64xbf16>
    %79 = vector.shape_cast %78 : vector<1x64x64xbf16> to vector<64x64xbf16>
    %cst_75 = arith.constant dense<0.000000e+00> : vector<8x64xf32>
    %80 = tpu.matmul %77, %79, %cst_75 {dimension_numbers = #tpu.dot_dimension_numbers<[1], [0], [0], [1], [0, 0, 1, 1], [], []>} : vector<8x64xbf16>, vector<64x64xbf16>, vector<8x64xf32> -> vector<8x64xf32>
    %81 = arith.addf %76, %80 : vector<8x64xf32>
    %82 = vector.extract_strided_slice %72 {offsets = [2, 0], sizes = [8, 64], strides = [1, 1]} : vector<10x64xbf16> to vector<8x64xbf16>
    %c2_76 = arith.constant 2 : index
    %c0_77 = arith.constant 0 : index
    %c0_78 = arith.constant 0 : index
    %83 = vector.load %arg10[%c2_76, %c0_77, %c0_78] : memref<3x64x64xbf16, #tpu.memory_space<vmem>>, vector<1x64x64xbf16>
    %84 = vector.shape_cast %83 : vector<1x64x64xbf16> to vector<64x64xbf16>
    %cst_79 = arith.constant dense<0.000000e+00> : vector<8x64xf32>
    %85 = tpu.matmul %82, %84, %cst_79 {dimension_numbers = #tpu.dot_dimension_numbers<[1], [0], [0], [1], [0, 0, 1, 1], [], []>} : vector<8x64xbf16>, vector<64x64xbf16>, vector<8x64xf32> -> vector<8x64xf32>
    %86 = arith.addf %81, %85 : vector<8x64xf32>
    %c0_80 = arith.constant 0 : index
    %c0_81 = arith.constant 0 : index
    %87 = vector.load %arg11[%c0_80, %c0_81] : memref<1x64xf32, #tpu.memory_space<vmem>>, vector<1x64xf32>
    %88 = vector.broadcast %87 : vector<1x64xf32> to vector<8x64xf32>
    %89 = arith.addf %86, %88 : vector<8x64xf32>
    %cst_82 = arith.constant 0.000000e+00 : f32
    %90 = vector.broadcast %cst_82 : f32 to vector<8x64xf32>
    %91 = arith.maximumf %89, %90 : vector<8x64xf32>
    %cst_83 = arith.constant 0.000000e+00 : f32
    %92 = vector.broadcast %cst_83 : f32 to vector<1x64xf32>
    %c0_84 = arith.constant 0 : index
    %c0_85 = arith.constant 0 : index
    %93 = vector.load %arg17[%c0_84, %c0_85] : memref<10x64xf32, #tpu.memory_space<vmem>>, vector<1x64xf32>
    tpu.vector_store %arg17[%c0_84, %c0_85], %92 {strides = array<i32>} : memref<10x64xf32, #tpu.memory_space<vmem>>, vector<1x64xf32>,
    %c9_86 = arith.constant 9 : index
    %c0_87 = arith.constant 0 : index
    %94 = vector.load %arg17[%c9_86, %c0_87] : memref<10x64xf32, #tpu.memory_space<vmem>>, vector<1x64xf32>
    tpu.vector_store %arg17[%c9_86, %c0_87], %92 {strides = array<i32>} : memref<10x64xf32, #tpu.memory_space<vmem>>, vector<1x64xf32>,
    %c1_88 = arith.constant 1 : index
    %c0_89 = arith.constant 0 : index
    %95 = vector.load %arg17[%c1_88, %c0_89] : memref<10x64xf32, #tpu.memory_space<vmem>>, vector<8x64xf32>
    tpu.vector_store %arg17[%c1_88, %c0_89], %91 {strides = array<i32>} : memref<10x64xf32, #tpu.memory_space<vmem>>, vector<8x64xf32>,
    %c0_90 = arith.constant 0 : index
    %c0_91 = arith.constant 0 : index
    %96 = vector.load %arg17[%c0_90, %c0_91] : memref<10x64xf32, #tpu.memory_space<vmem>>, vector<10x64xf32>
    %97 = arith.truncf %96 : vector<10x64xf32> to vector<10x64xbf16>
    %98 = vector.extract_strided_slice %97 {offsets = [0, 0], sizes = [8, 64], strides = [1, 1]} : vector<10x64xbf16> to vector<8x64xbf16>
    %c0_92 = arith.constant 0 : index
    %c0_93 = arith.constant 0 : index
    %c0_94 = arith.constant 0 : index
    %99 = vector.load %arg12[%c0_92, %c0_93, %c0_94] : memref<3x64x64xbf16, #tpu.memory_space<vmem>>, vector<1x64x64xbf16>
    %100 = vector.shape_cast %99 : vector<1x64x64xbf16> to vector<64x64xbf16>
    %cst_95 = arith.constant dense<0.000000e+00> : vector<8x64xf32>
    %101 = tpu.matmul %98, %100, %cst_95 {dimension_numbers = #tpu.dot_dimension_numbers<[1], [0], [0], [1], [0, 0, 1, 1], [], []>} : vector<8x64xbf16>, vector<64x64xbf16>, vector<8x64xf32> -> vector<8x64xf32>
    %102 = vector.extract_strided_slice %97 {offsets = [1, 0], sizes = [8, 64], strides = [1, 1]} : vector<10x64xbf16> to vector<8x64xbf16>
    %c1_96 = arith.constant 1 : index
    %c0_97 = arith.constant 0 : index
    %c0_98 = arith.constant 0 : index
    %103 = vector.load %arg12[%c1_96, %c0_97, %c0_98] : memref<3x64x64xbf16, #tpu.memory_space<vmem>>, vector<1x64x64xbf16>
    %104 = vector.shape_cast %103 : vector<1x64x64xbf16> to vector<64x64xbf16>
    %cst_99 = arith.constant dense<0.000000e+00> : vector<8x64xf32>
    %105 = tpu.matmul %102, %104, %cst_99 {dimension_numbers = #tpu.dot_dimension_numbers<[1], [0], [0], [1], [0, 0, 1, 1], [], []>} : vector<8x64xbf16>, vector<64x64xbf16>, vector<8x64xf32> -> vector<8x64xf32>
    %106 = arith.addf %101, %105 : vector<8x64xf32>
    %107 = vector.extract_strided_slice %97 {offsets = [2, 0], sizes = [8, 64], strides = [1, 1]} : vector<10x64xbf16> to vector<8x64xbf16>
    %c2_100 = arith.constant 2 : index
    %c0_101 = arith.constant 0 : index
    %c0_102 = arith.constant 0 : index
    %108 = vector.load %arg12[%c2_100, %c0_101, %c0_102] : memref<3x64x64xbf16, #tpu.memory_space<vmem>>, vector<1x64x64xbf16>
    %109 = vector.shape_cast %108 : vector<1x64x64xbf16> to vector<64x64xbf16>
    %cst_103 = arith.constant dense<0.000000e+00> : vector<8x64xf32>
    %110 = tpu.matmul %107, %109, %cst_103 {dimension_numbers = #tpu.dot_dimension_numbers<[1], [0], [0], [1], [0, 0, 1, 1], [], []>} : vector<8x64xbf16>, vector<64x64xbf16>, vector<8x64xf32> -> vector<8x64xf32>
    %111 = arith.addf %106, %110 : vector<8x64xf32>
    %112 = arith.addf %111, %58 : vector<8x64xf32>
    %c0_104 = arith.constant 0 : index
    %c0_105 = arith.constant 0 : index
    %c0_106 = arith.constant 0 : index
    %113 = vector.load %arg13[%c0_104, %c0_105, %c0_106] : memref<1x8x64xf32, #tpu.memory_space<vmem>>, vector<1x8x64xf32>
    %114 = vector.shape_cast %113 : vector<1x8x64xf32> to vector<8x64xf32>
    %115 = vector.shape_cast %112 : vector<8x64xf32> to vector<1x8x64xf32>
    tpu.vector_store %arg13[%c0_104, %c0_105, %c0_106], %115 {strides = array<i32>} : memref<1x8x64xf32, #tpu.memory_space<vmem>>, vector<1x8x64xf32>,
    return
  }
  func.func @transform_0(%arg0: i32) -> (i32, i32, i32) {
    %c0_i32 = arith.constant 0 : i32
    %c0_i32_0 = arith.constant 0 : i32
    %c0_i32_1 = arith.constant 0 : i32
    return %arg0, %c0_i32, %c0_i32_0 : i32, i32, i32
  }
  func.func @transform_1(%arg0: i32) -> (i32, i32) {
    %c0_i32 = arith.constant 0 : i32
    %c0_i32_0 = arith.constant 0 : i32
    %c0_i32_1 = arith.constant 0 : i32
    return %c0_i32, %c0_i32_0 : i32, i32
  }
  func.func @transform_2(%arg0: i32) -> (i32, i32) {
    %c0_i32 = arith.constant 0 : i32
    %c0_i32_0 = arith.constant 0 : i32
    %c0_i32_1 = arith.constant 0 : i32
    return %c0_i32, %c0_i32_0 : i32, i32
  }
  func.func @transform_3(%arg0: i32) -> (i32, i32, i32) {
    %c0_i32 = arith.constant 0 : i32
    %c0_i32_0 = arith.constant 0 : i32
    %c0_i32_1 = arith.constant 0 : i32
    %c0_i32_2 = arith.constant 0 : i32
    return %c0_i32, %c0_i32_0, %c0_i32_1 : i32, i32, i32
  }
  func.func @transform_4(%arg0: i32) -> (i32, i32) {
    %c0_i32 = arith.constant 0 : i32
    %c0_i32_0 = arith.constant 0 : i32
    %c0_i32_1 = arith.constant 0 : i32
    return %c0_i32, %c0_i32_0 : i32, i32
  }
  func.func @transform_5(%arg0: i32) -> (i32, i32, i32) {
    %c0_i32 = arith.constant 0 : i32
    %c0_i32_0 = arith.constant 0 : i32
    %c0_i32_1 = arith.constant 0 : i32
    %c0_i32_2 = arith.constant 0 : i32
    return %c0_i32, %c0_i32_0, %c0_i32_1 : i32, i32, i32
  }
  func.func @transform_6(%arg0: i32) -> (i32, i32) {
    %c0_i32 = arith.constant 0 : i32
    %c0_i32_0 = arith.constant 0 : i32
    %c0_i32_1 = arith.constant 0 : i32
    return %c0_i32, %c0_i32_0 : i32, i32
  }
  func.func @transform_7(%arg0: i32) -> (i32, i32) {
    %c0_i32 = arith.constant 0 : i32
    %c0_i32_0 = arith.constant 0 : i32
    %c0_i32_1 = arith.constant 0 : i32
    return %c0_i32, %c0_i32_0 : i32, i32
  }
  func.func @transform_8(%arg0: i32) -> (i32, i32) {
    %c0_i32 = arith.constant 0 : i32
    %c0_i32_0 = arith.constant 0 : i32
    %c0_i32_1 = arith.constant 0 : i32
    return %c0_i32, %c0_i32_0 : i32, i32
  }
  func.func @transform_9(%arg0: i32) -> (i32, i32, i32) {
    %c0_i32 = arith.constant 0 : i32
    %c0_i32_0 = arith.constant 0 : i32
    %c0_i32_1 = arith.constant 0 : i32
    %c0_i32_2 = arith.constant 0 : i32
    return %c0_i32, %c0_i32_0, %c0_i32_1 : i32, i32, i32
  }
  func.func @transform_10(%arg0: i32) -> (i32, i32) {
    %c0_i32 = arith.constant 0 : i32
    %c0_i32_0 = arith.constant 0 : i32
    %c0_i32_1 = arith.constant 0 : i32
    return %c0_i32, %c0_i32_0 : i32, i32
  }
  func.func @transform_11(%arg0: i32) -> (i32, i32, i32) {
    %c0_i32 = arith.constant 0 : i32
    %c0_i32_0 = arith.constant 0 : i32
    %c0_i32_1 = arith.constant 0 : i32
    %c0_i32_2 = arith.constant 0 : i32
    return %c0_i32, %c0_i32_0, %c0_i32_1 : i32, i32, i32
  }
  func.func @transform_12(%arg0: i32) -> (i32, i32, i32) {
    %c0_i32 = arith.constant 0 : i32
    %c0_i32_0 = arith.constant 0 : i32
    %c0_i32_1 = arith.constant 0 : i32
    return %arg0, %c0_i32, %c0_i32_0 : i32, i32, i32
  }
}

</mosaic_0001>

<llo_original>
// kernel: mul.9
$region0: #{mul.9}
  %s0 = inlined_call_operand.vmem [shape: f32[8,8], index: 0, kind: input, shape index: {}]
  %s1 = inlined_call_operand.vmem [shape: f32[64], index: 1, kind: output, shape index: {}]
  $region1: #{mul.9} parent=0
    #allocation0 [shape = 'u8[4096]{0}', space=vmem, size = 0x1000, scoped, tag = 'scoped mem for output reshape']
    %v2 = vld [vmem:[%s0] sm:$0x1]
    %vm3 = vcmask 64512
    %4 = vst.msk [vmem:[#allocation0] sm:$0x1] %vm3, %v2
    %s5 = scalar_lea.vmem %s0, 7
    %v6 = vld [vmem:[%s5] sm:$0x1]
    %7 = vrot.lane.b32.xlu0 %v6, 56
    %v8 = vpop.permute.xlu0 %7
    %vm9 = vcmask 523712
    %10 = vst.msk [vmem:[#allocation0] sm:$0x1] %vm9, %v8
    %s11 = scalar_lea.vmem %s0, 6
    %v12 = vld [vmem:[%s11] sm:$0x1]
    %13 = vrot.lane.b32.xlu0 %v12, 48
    %v14 = vpop.permute.xlu0 %13
    %vm15 = vcmask 458112
    %16 = vst.msk [vmem:[#allocation0] sm:$0x1] %vm15, %v14
    %s17 = scalar_lea.vmem %s0, 5
    %v18 = vld [vmem:[%s17] sm:$0x1]
    %19 = vrot.lane.b32.xlu0 %v18, 40
    %v20 = vpop.permute.xlu0 %19
    %vm21 = vcmask 392512
    %22 = vst.msk [vmem:[#allocation0] sm:$0x1] %vm21, %v20
    %s23 = scalar_lea.vmem %s0, 4
    %v24 = vld [vmem:[%s23] sm:$0x1]
    %25 = vrot.lane.b32.xlu0 %v24, 32
    %v26 = vpop.permute.xlu0 %25
    %vm27 = vcmask 326912
    %28 = vst.msk [vmem:[#allocation0] sm:$0x1] %vm27, %v26
    %s29 = scalar_lea.vmem %s0, 3
    %v30 = vld [vmem:[%s29] sm:$0x1]
    %31 = vrot.lane.b32.xlu0 %v30, 24
    %v32 = vpop.permute.xlu0 %31
    %vm33 = vcmask 261312
    %34 = vst.msk [vmem:[#allocation0] sm:$0x1] %vm33, %v32
    %s35 = scalar_lea.vmem %s0, 2
    %v36 = vld [vmem:[%s35] sm:$0x1]
    %37 = vrot.lane.b32.xlu0 %v36, 16
    %v38 = vpop.permute.xlu0 %37
    %vm39 = vcmask 195712
    %40 = vst.msk [vmem:[#allocation0] sm:$0x1] %vm39, %v38
    %s41 = scalar_lea.vmem %s0, 1
    %v42 = vld [vmem:[%s41] sm:$0x1]
    %43 = vrot.lane.b32.xlu0 %v42, 8
    %v44 = vpop.permute.xlu0 %43
    %vm45 = vcmask 130112
    %46 = vst.msk [vmem:[#allocation0] sm:$0x1] %vm45, %v44
    %s48 = sshllo.u32 0, 1
    %v50 = vld [vmem:[#allocation0] sm:%s48]
    %s51 = sshllo.u32 0, 1
    %52 = vst [vmem:[%s1] sm:%s51] %v50

// kernel: tile.47
$region0: #{tile.47}
  %s0 = inlined_call_operand.vmem [shape: f32[8,8], index: 0, kind: input, shape index: {}]
  %s1 = inlined_call_operand.vmem [shape: f32[1,64], index: 1, kind: output, shape index: {}]
  $region1: #{tile.47} parent=0
    #allocation0 [shape = 'u8[4096]{0}', space=vmem, size = 0x1000, scoped, tag = 'scoped mem for output reshape']
    %v2 = vld [vmem:[%s0] sm:$0x1]
    %vm3 = vcmask 64512
    %4 = vst.msk [vmem:[#allocation0] sm:$0x1] %vm3, %v2
    %s5 = scalar_lea.vmem %s0, 7
    %v6 = vld [vmem:[%s5] sm:$0x1]
    %7 = vrot.lane.b32.xlu0 %v6, 56
    %v8 = vpop.permute.xlu0 %7
    %vm9 = vcmask 523712
    %10 = vst.msk [vmem:[#allocation0] sm:$0x1] %vm9, %v8
    %s11 = scalar_lea.vmem %s0, 6
    %v12 = vld [vmem:[%s11] sm:$0x1]
    %13 = vrot.lane.b32.xlu0 %v12, 48
    %v14 = vpop.permute.xlu0 %13
    %vm15 = vcmask 458112
    %16 = vst.msk [vmem:[#allocation0] sm:$0x1] %vm15, %v14
    %s17 = scalar_lea.vmem %s0, 5
    %v18 = vld [vmem:[%s17] sm:$0x1]
    %19 = vrot.lane.b32.xlu0 %v18, 40
    %v20 = vpop.permute.xlu0 %19
    %vm21 = vcmask 392512
    %22 = vst.msk [vmem:[#allocation0] sm:$0x1] %vm21, %v20
    %s23 = scalar_lea.vmem %s0, 4
    %v24 = vld [vmem:[%s23] sm:$0x1]
    %25 = vrot.lane.b32.xlu0 %v24, 32
    %v26 = vpop.permute.xlu0 %25
    %vm27 = vcmask 326912
    %28 = vst.msk [vmem:[#allocation0] sm:$0x1] %vm27, %v26
    %s29 = scalar_lea.vmem %s0, 3
    %v30 = vld [vmem:[%s29] sm:$0x1]
    %31 = vrot.lane.b32.xlu0 %v30, 24
    %v32 = vpop.permute.xlu0 %31
    %vm33 = vcmask 261312
    %34 = vst.msk [vmem:[#allocation0] sm:$0x1] %vm33, %v32
    %s35 = scalar_lea.vmem %s0, 2
    %v36 = vld [vmem:[%s35] sm:$0x1]
    %37 = vrot.lane.b32.xlu0 %v36, 16
    %v38 = vpop.permute.xlu0 %37
    %vm39 = vcmask 195712
    %40 = vst.msk [vmem:[#allocation0] sm:$0x1] %vm39, %v38
    %s41 = scalar_lea.vmem %s0, 1
    %v42 = vld [vmem:[%s41] sm:$0x1]
    %43 = vrot.lane.b32.xlu0 %v42, 8
    %v44 = vpop.permute.xlu0 %43
    %vm45 = vcmask 130112
    %46 = vst.msk [vmem:[#allocation0] sm:$0x1] %vm45, %v44
    %s48 = sshllo.u32 0, 1
    %v50 = vld [vmem:[#allocation0] sm:%s48]
    %s51 = sshllo.u32 0, 1
    %52 = vst [vmem:[%s1] sm:%s51] %v50

// kernel: tile.34
$region0: #{tile.34}
  #allocation0 [shape = 's32[1]{0}', space=sflag, size = 0x4, scoped, tag = 'scoped memory for tile.34']
  %s0 = inlined_call_operand.vmem [shape: f32[8], index: 0, kind: input, shape index: {}]
  %s1 = inlined_call_operand.vmem [shape: f32[8,8], index: 1, kind: output, shape index: {}]
  // Predicated region
  $region2: #{tile.34} parent=0 // pred_check
    _
  $region3: #{tile.34} parent=0 // pred_check_branch
    %3 = sbr.rel (0) target = $region5
  $region4: #{tile.34} parent=0 // pred_region
    _
  $region5: #{tile.34} parent=0 // pred_fallthru
    _
  %v4 = vld [vmem:[%s0] ss:$0 sm:$0xff]
  %5 = vst [vmem:[%s1] sm:$0xff] %v4

// kernel: tile.38
$region0: #{tile.38}
  #allocation0 [shape = 's32[1]{0}', space=sflag, size = 0x4, scoped, tag = 'scoped memory for tile.38']
  %s0 = inlined_call_operand.vmem [shape: f32[4], index: 0, kind: input, shape index: {}]
  %s1 = inlined_call_operand.vmem [shape: f32[16,4], index: 1, kind: output, shape index: {}]
  // Predicated region
  $region2: #{tile.38} parent=0 // pred_check
    _
  $region3: #{tile.38} parent=0 // pred_check_branch
    %3 = sbr.rel (0) target = $region5
  $region4: #{tile.38} parent=0 // pred_region
    _
  $region5: #{tile.38} parent=0 // pred_fallthru
    _
  %v4 = vld [vmem:[%s0] ss:$0 sm:$0xff]
  %5 = vst [vmem:[%s1] sm:$0xff] %v4
  %s6 = scalar_lea.vmem %s1, 8
  %7 = vst [vmem:[%s6] sm:$0xff] %v4

// kernel: tile.39
$region0: #{tile.39}
  %s0 = inlined_call_operand.vmem [shape: f32[16,4], index: 0, kind: input, shape index: {}]
  %s1 = inlined_call_operand.vmem [shape: f32[1,64], index: 1, kind: output, shape index: {}]
  $region1: #{tile.39} parent=0
    #allocation0 [shape = 'u8[4096]{0}', space=vmem, size = 0x1000, scoped, tag = 'scoped mem for output reshape']
    %v2 = vld [vmem:[%s0] sm:$0x1]
    %vm3 = vcmask 31744
    %4 = vst.msk [vmem:[#allocation0] sm:$0x1] %vm3, %v2
    %s5 = scalar_lea.vmem %s0, 15
    %v6 = vld [vmem:[%s5] sm:$0x1]
    %7 = vrot.lane.b32.xlu0 %v6, 60
    %v8 = vpop.permute.xlu0 %7
    %vm9 = vcmask 523744
    %10 = vst.msk [vmem:[#allocation0] sm:$0x1] %vm9, %v8
    %s11 = scalar_lea.vmem %s0, 14
    %v12 = vld [vmem:[%s11] sm:$0x1]
    %13 = vrot.lane.b32.xlu0 %v12, 56
    %v14 = vpop.permute.xlu0 %13
    %vm15 = vcmask 490944
    %16 = vst.msk [vmem:[#allocation0] sm:$0x1] %vm15, %v14
    %s17 = scalar_lea.vmem %s0, 13
    %v18 = vld [vmem:[%s17] sm:$0x1]
    %19 = vrot.lane.b32.xlu0 %v18, 52
    %v20 = vpop.permute.xlu0 %19
    %vm21 = vcmask 458144
    %22 = vst.msk [vmem:[#allocation0] sm:$0x1] %vm21, %v20
    %s23 = scalar_lea.vmem %s0, 12
    %v24 = vld [vmem:[%s23] sm:$0x1]
    %25 = vrot.lane.b32.xlu0 %v24, 48
    %v26 = vpop.permute.xlu0 %25
    %vm27 = vcmask 425344
    %28 = vst.msk [vmem:[#allocation0] sm:$0x1] %vm27, %v26
    %s29 = scalar_lea.vmem %s0, 11
    %v30 = vld [vmem:[%s29] sm:$0x1]
    %31 = vrot.lane.b32.xlu0 %v30, 44
    %v32 = vpop.permute.xlu0 %31
    %vm33 = vcmask 392544
    %34 = vst.msk [vmem:[#allocation0] sm:$0x1] %vm33, %v32
    %s35 = scalar_lea.vmem %s0, 10
    %v36 = vld [vmem:[%s35] sm:$0x1]
    %37 = vrot.lane.b32.xlu0 %v36, 40
    %v38 = vpop.permute.xlu0 %37
    %vm39 = vcmask 359744
    %40 = vst.msk [vmem:[#allocation0] sm:$0x1] %vm39, %v38
    %s41 = scalar_lea.vmem %s0, 9
    %v42 = vld [vmem:[%s41] sm:$0x1]
    %43 = vrot.lane.b32.xlu0 %v42, 36
    %v44 = vpop.permute.xlu0 %43
    %vm45 = vcmask 326944
    %46 = vst.msk [vmem:[#allocation0] sm:$0x1] %vm45, %v44
    %s47 = scalar_lea.vmem %s0, 8
    %v48 = vld [vmem:[%s47] sm:$0x1]
    %49 = vrot.lane.b32.xlu0 %v48, 32
    %v50 = vpop.permute.xlu0 %49
    %vm51 = vcmask 294144
    %52 = vst.msk [vmem:[#allocation0] sm:$0x1] %vm51, %v50
    %s53 = scalar_lea.vmem %s0, 7
    %v54 = vld [vmem:[%s53] sm:$0x1]
    %55 = vrot.lane.b32.xlu0 %v54, 28
    %v56 = vpop.permute.xlu0 %55
    %vm57 = vcmask 261344
    %58 = vst.msk [vmem:[#allocation0] sm:$0x1] %vm57, %v56
    %s59 = scalar_lea.vmem %s0, 6
    %v60 = vld [vmem:[%s59] sm:$0x1]
    %61 = vrot.lane.b32.xlu0 %v60, 24
    %v62 = vpop.permute.xlu0 %61
    %vm63 = vcmask 228544
    %64 = vst.msk [vmem:[#allocation0] sm:$0x1] %vm63, %v62
    %s65 = scalar_lea.vmem %s0, 5
    %v66 = vld [vmem:[%s65] sm:$0x1]
    %67 = vrot.lane.b32.xlu0 %v66, 20
    %v68 = vpop.permute.xlu0 %67
    %vm69 = vcmask 195744
    %70 = vst.msk [vmem:[#allocation0] sm:$0x1] %vm69, %v68
    %s71 = scalar_lea.vmem %s0, 4
    %v72 = vld [vmem:[%s71] sm:$0x1]
    %73 = vrot.lane.b32.xlu0 %v72, 16
    %v74 = vpop.permute.xlu0 %73
    %vm75 = vcmask 162944
    %76 = vst.msk [vmem:[#allocation0] sm:$0x1] %vm75, %v74
    %s77 = scalar_lea.vmem %s0, 3
    %v78 = vld [vmem:[%s77] sm:$0x1]
    %79 = vrot.lane.b32.xlu0 %v78, 12
    %v80 = vpop.permute.xlu0 %79
    %vm81 = vcmask 130144
    %82 = vst.msk [vmem:[#allocation0] sm:$0x1] %vm81, %v80
    %s83 = scalar_lea.vmem %s0, 2
    %v84 = vld [vmem:[%s83] sm:$0x1]
    %85 = vrot.lane.b32.xlu0 %v84, 8
    %v86 = vpop.permute.xlu0 %85
    %vm87 = vcmask 97344
    %88 = vst.msk [vmem:[#allocation0] sm:$0x1] %vm87, %v86
    %s89 = scalar_lea.vmem %s0, 1
    %v90 = vld [vmem:[%s89] sm:$0x1]
    %91 = vrot.lane.b32.xlu0 %v90, 4
    %v92 = vpop.permute.xlu0 %91
    %vm93 = vcmask 64544
    %94 = vst.msk [vmem:[#allocation0] sm:$0x1] %vm93, %v92
    %s96 = sshllo.u32 0, 1
    %v98 = vld [vmem:[#allocation0] sm:%s96]
    %s99 = sshllo.u32 0, 1
    %100 = vst [vmem:[%s1] sm:%s99] %v98

// kernel: _lambda_.1
$region0: #{_lambda_.1}
  #allocation0 [shape = 'u32[]', space=smem, size = 0x4, offset = 0x4, fixed_abs, tag = 'smem constant byte address 0x4 - core index']
  #allocation1 [shape = 'u32[144,128]{1,0:T(1,128)}', space=vmem, size = 0x12000, scoped, tag = 'internal scratch']
  #allocation2 [shape = 'f32[18,64]{1,0:T(8,128)}', space=vmem, size = 0x3000, scoped, tag = 'scratch operand']
  #allocation3 [shape = 'f32[10,64]{1,0:T(8,128)}', space=vmem, size = 0x2000, scoped, tag = 'scratch operand']
  #allocation4 [shape = 'f32[10,64]{1,0:T(8,128)}', space=vmem, size = 0x2000, scoped, tag = 'scratch operand']
  #allocation5 [shape = 'f32[10,64]{1,0:T(8,128)}', space=vmem, size = 0x2000, scoped, tag = 'scratch operand']
  %s0 = inlined_call_operand.vmem [shape: f32[2,16,64], index: 0, kind: input, shape index: {}]
  %s1 = inlined_call_operand.vmem [shape: f32[1,64], index: 1, kind: input, shape index: {}]
  %s2 = inlined_call_operand.vmem [shape: f32[1,64], index: 2, kind: input, shape index: {}]
  %s3 = inlined_call_operand.vmem [shape: bf16[3,64,64], index: 3, kind: input, shape index: {}]
  %s4 = inlined_call_operand.vmem [shape: f32[1,64], index: 4, kind: input, shape index: {}]
  %s5 = inlined_call_operand.vmem [shape: bf16[3,64,64], index: 5, kind: input, shape index: {}]
  %s6 = inlined_call_operand.vmem [shape: bf16[64,64], index: 6, kind: input, shape index: {}]
  %s7 = inlined_call_operand.vmem [shape: f32[1,64], index: 7, kind: input, shape index: {}]
  %s8 = inlined_call_operand.vmem [shape: f32[1,64], index: 8, kind: input, shape index: {}]
  %s9 = inlined_call_operand.vmem [shape: bf16[3,64,64], index: 9, kind: input, shape index: {}]
  %s10 = inlined_call_operand.vmem [shape: f32[1,64], index: 10, kind: input, shape index: {}]
  %s11 = inlined_call_operand.vmem [shape: bf16[3,64,64], index: 11, kind: input, shape index: {}]
  %s12 = inlined_call_operand.vmem [shape: f32[2,8,64], index: 12, kind: output, shape index: {}]
  %s13 = sld [smem:[#allocation0]]
  $region81: #{_lambda_.1} parent=0
    _
  %s15 = ssub.s32 1, %s13
  %s16 = scalar_select 0, %s15, %s13
  loop: start=0, step=1, limit=4
  $region2: #{_lambda_.1} parent=0 // loop_pre_header
    _
  $region3: #{_lambda_.1} parent=0 // loop_header
    %s18 = sphi 0, %s22
    %p19 = scmp.ge.s32.totalorder %s18, 4
    %s28 = sphi 0, %s30
    %s31 = sphi 0, %s28
    %s32 = sphi 0, %s31
    %s48 = sphi 0, %s32
    %s52 = sphi 0, %s52
    %s54 = sphi 0, %s52
    %s55 = sphi 0, %s54
    %s69 = sphi 0, %s55
    %s73 = sphi 0, %s73
    %s75 = sphi 0, %s73
    %s76 = sphi 0, %s75
    %s90 = sphi 0, %s76
    %s94 = sphi 0, %s94
    %s96 = sphi 0, %s94
    %s97 = sphi 0, %s96
    %s111 = sphi 0, %s97
    %s115 = sphi 0, %s115
    %s117 = sphi 0, %s115
    %s118 = sphi 0, %s117
    %s132 = sphi 0, %s118
    %s136 = sphi 0, %s136
    %s138 = sphi 0, %s136
    %s139 = sphi 0, %s138
    %s153 = sphi 0, %s139
    %s157 = sphi 0, %s157
    %s159 = sphi 0, %s157
    %s160 = sphi 0, %s159
    %s174 = sphi 0, %s160
    %s178 = sphi 0, %s178
    %s180 = sphi 0, %s178
    %s181 = sphi 0, %s180
    %s195 = sphi 0, %s181
    %s199 = sphi 0, %s199
    %s201 = sphi 0, %s199
    %s202 = sphi 0, %s201
    %s216 = sphi 0, %s202
    %s220 = sphi 0, %s220
    %s222 = sphi 0, %s220
    %s223 = sphi 0, %s222
    %s237 = sphi 0, %s223
    %s241 = sphi 0, %s241
    %s243 = sphi 0, %s241
    %s244 = sphi 0, %s243
    %s258 = sphi 0, %s244
    %s262 = sphi 0, %s262
    %s264 = sphi 0, %s262
    %s265 = sphi 0, %s264
    %s279 = sphi 0, %s265
    %s285 = sphi 0, %s287
    %s288 = sphi 0, %s285
    %s289 = sphi 0, %s288
    %s305 = sphi 0, %s289
  $region4: #{_lambda_.1} parent=0 // loop_header_branch
    %21 = sbr.rel (%p19) target = $region8
  $region5: #{_lambda_.1} parent=0 // loop_body
    %s23 = ssub.s32 %s18, 1
    %s24 = ssub.s32 %s18, 2
    %s25 = sadd.s32 %s18, 1
    %s26 = ssub.s32 %s18, %s25
    %p27 = scmp.eq.s32.totalorder %s26, 0
    %s29 = sadd.s32 %s28, 1
    %s30 = scalar_select %p27, %s28, %s29
    %p33 = pneg %p27
    %p34 = scmp.eq.s32.totalorder %s18, 1
    %p35 = por %p33, %p34
    %p36 = scmp.ne.s32.totalorder %s28, %s31
    %p37 = scmp.eq.s32.totalorder %s18, 0
    %p38 = por %p36, %p37
    %p39 = scmp.ne.s32.totalorder %s28, %s31
    %p40 = scmp.eq.s32.totalorder %s23, 1
    %p41 = por %p39, %p40
    %p42 = scmp.ne.s32.totalorder %s31, %s32
    %p43 = scmp.eq.s32.totalorder %s23, 0
    %p44 = por %p42, %p43
    %p45 = scmp.ne.s32.totalorder %s31, %s32
    %p46 = scmp.eq.s32.totalorder %s24, 1
    %p47 = por %p45, %p46
    %p49 = scmp.ne.s32.totalorder %s32, %s48
    %p50 = scmp.eq.s32.totalorder %s24, 0
    %p51 = por %p49, %p50
    %s53 = sadd.s32 %s52, 1
    %p56 = scmp.eq.s32.totalorder %s18, 1
    %p57 = scmp.ne.s32.totalorder %s52, %s54
    %p58 = scmp.eq.s32.totalorder %s18, 0
    %p59 = por %p57, %p58
    %p60 = scmp.ne.s32.totalorder %s52, %s54
    %p61 = scmp.eq.s32.totalorder %s23, 1
    %p62 = por %p60, %p61
    %p63 = scmp.ne.s32.totalorder %s54, %s55
    %p64 = scmp.eq.s32.totalorder %s23, 0
    %p65 = por %p63, %p64
    %p66 = scmp.ne.s32.totalorder %s54, %s55
    %p67 = scmp.eq.s32.totalorder %s24, 1
    %p68 = por %p66, %p67
    %p70 = scmp.ne.s32.totalorder %s55, %s69
    %p71 = scmp.eq.s32.totalorder %s24, 0
    %p72 = por %p70, %p71
    %s74 = sadd.s32 %s73, 1
    %p77 = scmp.eq.s32.totalorder %s18, 1
    %p78 = scmp.ne.s32.totalorder %s73, %s75
    %p79 = scmp.eq.s32.totalorder %s18, 0
    %p80 = por %p78, %p79
    %p81 = scmp.ne.s32.totalorder %s73, %s75
    %p82 = scmp.eq.s32.totalorder %s23, 1
    %p83 = por %p81, %p82
    %p84 = scmp.ne.s32.totalorder %s75, %s76
    %p85 = scmp.eq.s32.totalorder %s23, 0
    %p86 = por %p84, %p85
    %p87 = scmp.ne.s32.totalorder %s75, %s76
    %p88 = scmp.eq.s32.totalorder %s24, 1
    %p89 = por %p87, %p88
    %p91 = scmp.ne.s32.totalorder %s76, %s90
    %p92 = scmp.eq.s32.totalorder %s24, 0
    %p93 = por %p91, %p92
    %s95 = sadd.s32 %s94, 1
    %p98 = scmp.eq.s32.totalorder %s18, 1
    %p99 = scmp.ne.s32.totalorder %s94, %s96
    %p100 = scmp.eq.s32.totalorder %s18, 0
    %p101 = por %p99, %p100
    %p102 = scmp.ne.s32.totalorder %s94, %s96
    %p103 = scmp.eq.s32.totalorder %s23, 1
    %p104 = por %p102, %p103
    %p105 = scmp.ne.s32.totalorder %s96, %s97
    %p106 = scmp.eq.s32.totalorder %s23, 0
    %p107 = por %p105, %p106
    %p108 = scmp.ne.s32.totalorder %s96, %s97
    %p109 = scmp.eq.s32.totalorder %s24, 1
    %p110 = por %p108, %p109
    %p112 = scmp.ne.s32.totalorder %s97, %s111
    %p113 = scmp.eq.s32.totalorder %s24, 0
    %p114 = por %p112, %p113
    %s116 = sadd.s32 %s115, 1
    %p119 = scmp.eq.s32.totalorder %s18, 1
    %p120 = scmp.ne.s32.totalorder %s115, %s117
    %p121 = scmp.eq.s32.totalorder %s18, 0
    %p122 = por %p120, %p121
    %p123 = scmp.ne.s32.totalorder %s115, %s117
    %p124 = scmp.eq.s32.totalorder %s23, 1
    %p125 = por %p123, %p124
    %p126 = scmp.ne.s32.totalorder %s117, %s118
    %p127 = scmp.eq.s32.totalorder %s23, 0
    %p128 = por %p126, %p127
    %p129 = scmp.ne.s32.totalorder %s117, %s118
    %p130 = scmp.eq.s32.totalorder %s24, 1
    %p131 = por %p129, %p130
    %p133 = scmp.ne.s32.totalorder %s118, %s132
    %p134 = scmp.eq.s32.totalorder %s24, 0
    %p135 = por %p133, %p134
    %s137 = sadd.s32 %s136, 1
    %p140 = scmp.eq.s32.totalorder %s18, 1
    %p141 = scmp.ne.s32.totalorder %s136, %s138
    %p142 = scmp.eq.s32.totalorder %s18, 0
    %p143 = por %p141, %p142
    %p144 = scmp.ne.s32.totalorder %s136, %s138
    %p145 = scmp.eq.s32.totalorder %s23, 1
    %p146 = por %p144, %p145
    %p147 = scmp.ne.s32.totalorder %s138, %s139
    %p148 = scmp.eq.s32.totalorder %s23, 0
    %p149 = por %p147, %p148
    %p150 = scmp.ne.s32.totalorder %s138, %s139
    %p151 = scmp.eq.s32.totalorder %s24, 1
    %p152 = por %p150, %p151
    %p154 = scmp.ne.s32.totalorder %s139, %s153
    %p155 = scmp.eq.s32.totalorder %s24, 0
    %p156 = por %p154, %p155
    %s158 = sadd.s32 %s157, 1
    %p161 = scmp.eq.s32.totalorder %s18, 1
    %p162 = scmp.ne.s32.totalorder %s157, %s159
    %p163 = scmp.eq.s32.totalorder %s18, 0
    %p164 = por %p162, %p163
    %p165 = scmp.ne.s32.totalorder %s157, %s159
    %p166 = scmp.eq.s32.totalorder %s23, 1
    %p167 = por %p165, %p166
    %p168 = scmp.ne.s32.totalorder %s159, %s160
    %p169 = scmp.eq.s32.totalorder %s23, 0
    %p170 = por %p168, %p169
    %p171 = scmp.ne.s32.totalorder %s159, %s160
    %p172 = scmp.eq.s32.totalorder %s24, 1
    %p173 = por %p171, %p172
    %p175 = scmp.ne.s32.totalorder %s160, %s174
    %p176 = scmp.eq.s32.totalorder %s24, 0
    %p177 = por %p175, %p176
    %s179 = sadd.s32 %s178, 1
    %p182 = scmp.eq.s32.totalorder %s18, 1
    %p183 = scmp.ne.s32.totalorder %s178, %s180
    %p184 = scmp.eq.s32.totalorder %s18, 0
    %p185 = por %p183, %p184
    %p186 = scmp.ne.s32.totalorder %s178, %s180
    %p187 = scmp.eq.s32.totalorder %s23, 1
    %p188 = por %p186, %p187
    %p189 = scmp.ne.s32.totalorder %s180, %s181
    %p190 = scmp.eq.s32.totalorder %s23, 0
    %p191 = por %p189, %p190
    %p192 = scmp.ne.s32.totalorder %s180, %s181
    %p193 = scmp.eq.s32.totalorder %s24, 1
    %p194 = por %p192, %p193
    %p196 = scmp.ne.s32.totalorder %s181, %s195
    %p197 = scmp.eq.s32.totalorder %s24, 0
    %p198 = por %p196, %p197
    %s200 = sadd.s32 %s199, 1
    %p203 = scmp.eq.s32.totalorder %s18, 1
    %p204 = scmp.ne.s32.totalorder %s199, %s201
    %p205 = scmp.eq.s32.totalorder %s18, 0
    %p206 = por %p204, %p205
    %p207 = scmp.ne.s32.totalorder %s199, %s201
    %p208 = scmp.eq.s32.totalorder %s23, 1
    %p209 = por %p207, %p208
    %p210 = scmp.ne.s32.totalorder %s201, %s202
    %p211 = scmp.eq.s32.totalorder %s23, 0
    %p212 = por %p210, %p211
    %p213 = scmp.ne.s32.totalorder %s201, %s202
    %p214 = scmp.eq.s32.totalorder %s24, 1
    %p215 = por %p213, %p214
    %p217 = scmp.ne.s32.totalorder %s202, %s216
    %p218 = scmp.eq.s32.totalorder %s24, 0
    %p219 = por %p217, %p218
    %s221 = sadd.s32 %s220, 1
    %p224 = scmp.eq.s32.totalorder %s18, 1
    %p225 = scmp.ne.s32.totalorder %s220, %s222
    %p226 = scmp.eq.s32.totalorder %s18, 0
    %p227 = por %p225, %p226
    %p228 = scmp.ne.s32.totalorder %s220, %s222
    %p229 = scmp.eq.s32.totalorder %s23, 1
    %p230 = por %p228, %p229
    %p231 = scmp.ne.s32.totalorder %s222, %s223
    %p232 = scmp.eq.s32.totalorder %s23, 0
    %p233 = por %p231, %p232
    %p234 = scmp.ne.s32.totalorder %s222, %s223
    %p235 = scmp.eq.s32.totalorder %s24, 1
    %p236 = por %p234, %p235
    %p238 = scmp.ne.s32.totalorder %s223, %s237
    %p239 = scmp.eq.s32.totalorder %s24, 0
    %p240 = por %p238, %p239
    %s242 = sadd.s32 %s241, 1
    %p245 = scmp.eq.s32.totalorder %s18, 1
    %p246 = scmp.ne.s32.totalorder %s241, %s243
    %p247 = scmp.eq.s32.totalorder %s18, 0
    %p248 = por %p246, %p247
    %p249 = scmp.ne.s32.totalorder %s241, %s243
    %p250 = scmp.eq.s32.totalorder %s23, 1
    %p251 = por %p249, %p250
    %p252 = scmp.ne.s32.totalorder %s243, %s244
    %p253 = scmp.eq.s32.totalorder %s23, 0
    %p254 = por %p252, %p253
    %p255 = scmp.ne.s32.totalorder %s243, %s244
    %p256 = scmp.eq.s32.totalorder %s24, 1
    %p257 = por %p255, %p256
    %p259 = scmp.ne.s32.totalorder %s244, %s258
    %p260 = scmp.eq.s32.totalorder %s24, 0
    %p261 = por %p259, %p260
    %s263 = sadd.s32 %s262, 1
    %p266 = scmp.eq.s32.totalorder %s18, 1
    %p267 = scmp.ne.s32.totalorder %s262, %s264
    %p268 = scmp.eq.s32.totalorder %s18, 0
    %p269 = por %p267, %p268
    %p270 = scmp.ne.s32.totalorder %s262, %s264
    %p271 = scmp.eq.s32.totalorder %s23, 1
    %p272 = por %p270, %p271
    %p273 = scmp.ne.s32.totalorder %s264, %s265
    %p274 = scmp.eq.s32.totalorder %s23, 0
    %p275 = por %p273, %p274
    %p276 = scmp.ne.s32.totalorder %s264, %s265
    %p277 = scmp.eq.s32.totalorder %s24, 1
    %p278 = por %p276, %p277
    %p280 = scmp.ne.s32.totalorder %s265, %s279
    %p281 = scmp.eq.s32.totalorder %s24, 0
    %p282 = por %p280, %p281
    %s283 = ssub.s32 %s18, %s25
    %p284 = scmp.eq.s32.totalorder %s283, 0
    %s286 = sadd.s32 %s285, 1
    %s287 = scalar_select %p284, %s285, %s286
    %p290 = pneg %p284
    %p291 = scmp.eq.s32.totalorder %s18, 1
    %p292 = por %p290, %p291
    %p293 = scmp.ne.s32.totalorder %s285, %s288
    %p294 = scmp.eq.s32.totalorder %s18, 0
    %p295 = por %p293, %p294
    %p296 = scmp.ne.s32.totalorder %s285, %s288
    %p297 = scmp.eq.s32.totalorder %s23, 1
    %p298 = por %p296, %p297
    %p299 = scmp.ne.s32.totalorder %s288, %s289
    %p300 = scmp.eq.s32.totalorder %s23, 0
    %p301 = por %p299, %p300
    %p302 = scmp.ne.s32.totalorder %s288, %s289
    %p303 = scmp.eq.s32.totalorder %s24, 1
    %p304 = por %p302, %p303
    %p306 = scmp.ne.s32.totalorder %s289, %s305
    %p307 = scmp.eq.s32.totalorder %s24, 0
    %p308 = por %p306, %p307
    %p309 = scmp.le.s32.totalorder 1, %s18
    %p310 = scmp.lt.s32.totalorder %s18, 3
    %p311 = pnand %p309, %p310
    %p312 = pneg %p311
    // Predicated region
    $region9: #{_lambda_.1} parent=5 // pred_check
      _
    $region10: #{_lambda_.1} parent=5 // pred_check_branch
      %314 = sbr.rel (%p311) target = $region12
    $region11: #{_lambda_.1} parent=5 // pred_region
      %s315 = ssub.s32 %s18, 1
      // Predicated region
      $region13: #{_lambda_.1} parent=11 // pred_check
        %p316 = pneg %p65
      $region14: #{_lambda_.1} parent=11 // pred_check_branch
        %318 = sbr.rel (%p316) target = $region16
      $region15: #{_lambda_.1} parent=11 // pred_region
        _
      $region16: #{_lambda_.1} parent=11 // pred_fallthru
        _
      // Predicated region
      $region17: #{_lambda_.1} parent=11 // pred_check
        %p319 = pneg %p86
      $region18: #{_lambda_.1} parent=11 // pred_check_branch
        %321 = sbr.rel (%p319) target = $region20
      $region19: #{_lambda_.1} parent=11 // pred_region
        _
      $region20: #{_lambda_.1} parent=11 // pred_fallthru
        _
      // Predicated region
      $region21: #{_lambda_.1} parent=11 // pred_check
        %p322 = pneg %p107
      $region22: #{_lambda_.1} parent=11 // pred_check_branch
        %324 = sbr.rel (%p322) target = $region24
      $region23: #{_lambda_.1} parent=11 // pred_region
        _
      $region24: #{_lambda_.1} parent=11 // pred_fallthru
        _
      // Predicated region
      $region25: #{_lambda_.1} parent=11 // pred_check
        %p325 = pneg %p128
      $region26: #{_lambda_.1} parent=11 // pred_check_branch
        %327 = sbr.rel (%p325) target = $region28
      $region27: #{_lambda_.1} parent=11 // pred_region
        _
      $region28: #{_lambda_.1} parent=11 // pred_fallthru
        _
      // Predicated region
      $region29: #{_lambda_.1} parent=11 // pred_check
        %p328 = pneg %p149
      $region30: #{_lambda_.1} parent=11 // pred_check_branch
        %330 = sbr.rel (%p328) target = $region32
      $region31: #{_lambda_.1} parent=11 // pred_region
        _
      $region32: #{_lambda_.1} parent=11 // pred_fallthru
        _
      // Predicated region
      $region33: #{_lambda_.1} parent=11 // pred_check
        %p331 = pneg %p170
      $region34: #{_lambda_.1} parent=11 // pred_check_branch
        %333 = sbr.rel (%p331) target = $region36
      $region35: #{_lambda_.1} parent=11 // pred_region
        _
      $region36: #{_lambda_.1} parent=11 // pred_fallthru
        _
      // Predicated region
      $region37: #{_lambda_.1} parent=11 // pred_check
        %p334 = pneg %p191
      $region38: #{_lambda_.1} parent=11 // pred_check_branch
        %336 = sbr.rel (%p334) target = $region40
      $region39: #{_lambda_.1} parent=11 // pred_region
        _
      $region40: #{_lambda_.1} parent=11 // pred_fallthru
        _
      // Predicated region
      $region41: #{_lambda_.1} parent=11 // pred_check
        %p337 = pneg %p212
      $region42: #{_lambda_.1} parent=11 // pred_check_branch
        %339 = sbr.rel (%p337) target = $region44
      $region43: #{_lambda_.1} parent=11 // pred_region
        _
      $region44: #{_lambda_.1} parent=11 // pred_fallthru
        _
      // Predicated region
      $region45: #{_lambda_.1} parent=11 // pred_check
        %p340 = pneg %p233
      $region46: #{_lambda_.1} parent=11 // pred_check_branch
        %342 = sbr.rel (%p340) target = $region48
      $region47: #{_lambda_.1} parent=11 // pred_region
        _
      $region48: #{_lambda_.1} parent=11 // pred_fallthru
        _
      // Predicated region
      $region49: #{_lambda_.1} parent=11 // pred_check
        %p343 = pneg %p254
      $region50: #{_lambda_.1} parent=11 // pred_check_branch
        %345 = sbr.rel (%p343) target = $region52
      $region51: #{_lambda_.1} parent=11 // pred_region
        _
      $region52: #{_lambda_.1} parent=11 // pred_fallthru
        _
      // Predicated region
      $region53: #{_lambda_.1} parent=11 // pred_check
        %p346 = pneg %p275
      $region54: #{_lambda_.1} parent=11 // pred_check_branch
        %348 = sbr.rel (%p346) target = $region56
      $region55: #{_lambda_.1} parent=11 // pred_region
        _
      $region56: #{_lambda_.1} parent=11 // pred_fallthru
        _
    $region12: #{_lambda_.1} parent=5 // pred_fallthru
      _
    %p349 = scmp.lt.s32.totalorder %s18, 2
    // Predicated region
    $region57: #{_lambda_.1} parent=5 // pred_check
      %p350 = pneg %p349
    $region58: #{_lambda_.1} parent=5 // pred_check_branch
      %352 = sbr.rel (%p350) target = $region60
    $region59: #{_lambda_.1} parent=5 // pred_region
      // Predicated region
      $region61: #{_lambda_.1} parent=59 // pred_check
        %p353 = pneg %p38
      $region62: #{_lambda_.1} parent=59 // pred_check_branch
        %355 = sbr.rel (%p353) target = $region64
      $region63: #{_lambda_.1} parent=59 // pred_region
        %p356 = scmp.lt.s32.totalorder %s18, 1
        %s357 = scalar_select %p356, %s18, 1
        %s358 = smul.addr %s357, 2
        %s359 = smul.addr %s358, 8
        %s360 = scalar_lea.vmem %s0, %s359
      $region64: #{_lambda_.1} parent=59 // pred_fallthru
        _
    $region60: #{_lambda_.1} parent=5 // pred_fallthru
      _
    %p361 = scmp.le.s32.totalorder 1, %s18
    %p362 = scmp.lt.s32.totalorder %s18, 3
    %p363 = pnand %p361, %p362
    %p364 = pneg %p363
    // Predicated region
    $region65: #{_lambda_.1} parent=5 // pred_check
      _
    $region66: #{_lambda_.1} parent=5 // pred_check_branch
      %366 = sbr.rel (%p363) target = $region68
    $region67: #{_lambda_.1} parent=5 // pred_region
      %s367 = ssub.s32 %s18, 1
      %p368 = scmp.lt.s32.totalorder %s23, 1
      %s369 = scalar_select %p368, %s23, 1
      %s370 = smul.addr %s369, 2
      %s371 = smul.addr %s370, 8
      %s372 = scalar_lea.vmem %s0, %s371
      %p373 = pneg %p44
      %p374 = pneg %p41
      %p375 = pneg %p65
      %p376 = pneg %p62
      %p377 = pneg %p86
      %p378 = pneg %p83
      %p379 = pneg %p107
      %p380 = pneg %p104
      %p381 = pneg %p128
      %p382 = pneg %p125
      %p383 = pneg %p149
      %p384 = pneg %p146
      %p385 = pneg %p170
      %p386 = pneg %p167
      %p387 = pneg %p191
      %p388 = pneg %p188
      %p389 = pneg %p212
      %p390 = pneg %p209
      %p391 = pneg %p233
      %p392 = pneg %p230
      %p393 = pneg %p254
      %p394 = pneg %p251
      %p395 = pneg %p275
      %p396 = pneg %p272
      %p397 = pneg %p301
      %p398 = pneg %p298
      %p399 = scmp.lt.s32.totalorder %s23, 1
      %s400 = scalar_select %p399, %s23, 1
      %s401 = smul.addr %s400, 8
      %s402 = scalar_lea.vmem %s12, %s401
      %p403 = scmp.lt.s32.totalorder %s23, 1
      %s404 = scalar_select %p403, %s23, 1
      %s405 = smul.addr %s404, 2
      %s406 = smul.addr %s405, 8
      %s407 = scalar_lea.vmem %s0, %s406
      %p408 = scmp.lt.s32.totalorder %s23, 1
      %s409 = scalar_select %p408, %s23, 1
      %s410 = smul.addr %s409, 8
      %s411 = scalar_lea.vmem %s12, %s410
      %v413 = vld [vmem:[%s407] sm:$0xff]
      %v414 = vld [vmem:[%s407 + $0x8] sm:$0xff]
      %v415 = vld [vmem:[%s1] sm:$0x1]
      %v417 = vlaneseq
      %v418 = vshrl.u32 %v417, 7
      %v419 = vsub.s32 0, %v418
      %v420 = vrot.slane %v415, %v419
      %v422 = vmul.f32 %v413, %v420
      %v423 = vmul.f32 %v414, %v420
      %v424 = vld [vmem:[%s2] sm:$0x1]
      %v426 = vlaneseq
      %v427 = vshrl.u32 %v426, 7
      %v428 = vsub.s32 0, %v427
      %v429 = vrot.slane %v424, %v428
      %v431 = vadd.f32 %v422, %v429
      %v432 = vadd.f32 %v423, %v429
      %v433 = vmax.f32 %v431, 0.0
      %v434 = vmax.f32 %v432, 0.0
      %vm435 = vcmask 516096
      %436 = vst.msk [vmem:[#allocation2] sm:$0x1] %vm435, 0.0
      %437 = vst.msk [vmem:[#allocation2 + $0x11] sm:$0x1] %vm435, 0.0
      %vm438 = vcmask 523264
      %439 = vst.msk [vmem:[#allocation2 + $0x1] sm:$0xff] %vm438, %v433
      %440 = vst.msk [vmem:[#allocation2 + $0x9] sm:$0xff] %vm438, %v434
      %v441 = vld [vmem:[#allocation2] ss:$2 sm:$0xff]
      %v442 = vpack.c.bf16 %v441, %v441
      %v443 = vld [vmem:[%s3] sm:$0xf]
      %v444 = vld [vmem:[%s3 + $0x4] sm:$0xf]
      %v445 = vld [vmem:[%s3 + $0x8] sm:$0xf]
      %v446 = vld [vmem:[%s3 + $0xc] sm:$0xf]
      %v447 = vld [vmem:[%s3 + $0x10] sm:$0xf]
      %v448 = vld [vmem:[%s3 + $0x14] sm:$0xf]
      %v449 = vld [vmem:[%s3 + $0x18] sm:$0xf]
      %v450 = vld [vmem:[%s3 + $0x1c] sm:$0xf]
      %s451 = scalar_lea.vmem [#allocation2], 1
      %v452 = vld [vmem:[%s451] ss:$2 sm:$0xff]
      %v453 = vpack.c.bf16 %v452, %v452
      %s454 = scalar_lea.vmem %s3, 32
      %v455 = vld [vmem:[%s454] sm:$0xf]
      %v456 = vld [vmem:[%s454 + $0x4] sm:$0xf]
      %v457 = vld [vmem:[%s454 + $0x8] sm:$0xf]
      %v458 = vld [vmem:[%s454 + $0xc] sm:$0xf]
      %v459 = vld [vmem:[%s454 + $0x10] sm:$0xf]
      %v460 = vld [vmem:[%s454 + $0x14] sm:$0xf]
      %v461 = vld [vmem:[%s454 + $0x18] sm:$0xf]
      %v462 = vld [vmem:[%s454 + $0x1c] sm:$0xf]
      %v471 = vunpack.c.l.b16 %v455
      %v472 = vunpack.c.l.b16 %v456
      %v473 = vunpack.c.l.b16 %v457
      %v474 = vunpack.c.l.b16 %v458
      %v475 = vunpack.c.l.b16 %v459
      %v476 = vunpack.c.l.b16 %v460
      %v477 = vunpack.c.l.b16 %v461
      %v478 = vunpack.c.l.b16 %v462
      %v479 = vpack.c.b16 %v472, %v471
      %v480 = vpack.c.b16 %v474, %v473
      %v481 = vpack.c.b16 %v476, %v475
      %v482 = vpack.c.b16 %v478, %v477
      %v488 = vsel %vm438, %v453, 0
      %490 = vmatprep.subr.bf16.mxu0 0
      %491 = vmatpush1.bf16.msra.mxu0 %v479
      %492 = vmatprep.subr.bf16.mxu0 0
      %493 = vmatpush1.bf16.msra.mxu0 %v480
      %494 = vmatprep.subr.bf16.mxu0 0
      %495 = vmatpush1.bf16.msra.mxu0 %v481
      %496 = vmatprep.subr.bf16.mxu0 0
      %497 = vmatpush1.bf16.msra.mxu0 %v482
      %498 = vmatprep.subr.bf16.mxu0 0
      %499 = vmatpush1.bf16.msra.mxu0 0
      %500 = vmatprep.subr.bf16.mxu0 0
      %501 = vmatpush1.bf16.msra.mxu0 0
      %502 = vmatprep.subr.bf16.mxu0 0
      %503 = vmatpush1.bf16.msra.mxu0 0
      %504 = vmatprep.subr.bf16.mxu0 0
      %505 = vmatpush1.bf16.msra.mxu0 0
      %506 = vmatprep.subr.bf16.mxu0 0
      %507 = vmatpush1.bf16.msra.mxu0 0
      %508 = vmatprep.subr.bf16.mxu0 0
      %509 = vmatpush1.bf16.msra.mxu0 0
      %510 = vmatprep.subr.bf16.mxu0 0
      %511 = vmatpush1.bf16.msra.mxu0 0
      %512 = vmatprep.subr.bf16.mxu0 0
      %513 = vmatpush1.bf16.msra.mxu0 0
      %514 = vmatprep.subr.bf16.mxu0 0
      %515 = vmatpush1.bf16.msra.mxu0 0
      %516 = vmatprep.subr.bf16.mxu0 0
      %517 = vmatpush1.bf16.msra.mxu0 0
      %518 = vmatprep.subr.bf16.mxu0 0
      %519 = vmatpush1.bf16.msra.mxu0 0
      %520 = vmatprep.subr.bf16.mxu0 0
      %521 = vmatpush1.bf16.msra.mxu0 0
      %522 = vmatprep.mubr.bf16.mxu0 0
      %523 = vmatmul.mubr.bf16.gmra.mrb[0].mxu0 %v488
      %v524 = vpop.f32.mrb[0].mxu0
      %v525 = vadd.f32 0.0, %v524
      %v526 = vpop.f32.mrb[0].mxu0
      %v527 = vpop.f32.mrb[0].mxu0
      %v528 = vpop.f32.mrb[0].mxu0
      %529 = vdwg.mxu0
      %v538 = vunpack.c.l.b16 %v443
      %v539 = vunpack.c.l.b16 %v444
      %v540 = vunpack.c.l.b16 %v445
      %v541 = vunpack.c.l.b16 %v446
      %v542 = vunpack.c.l.b16 %v447
      %v543 = vunpack.c.l.b16 %v448
      %v544 = vunpack.c.l.b16 %v449
      %v545 = vunpack.c.l.b16 %v450
      %v546 = vpack.c.b16 %v539, %v538
      %v547 = vpack.c.b16 %v541, %v540
      %v548 = vpack.c.b16 %v543, %v542
      %v549 = vpack.c.b16 %v545, %v544
      %v555 = vsel %vm438, %v442, 0
      %557 = vmatprep.subr.bf16.mxu0 0
      %558 = vmatpush1.bf16.msra.mxu0 %v546
      %559 = vmatprep.subr.bf16.mxu0 0
      %560 = vmatpush1.bf16.msra.mxu0 %v547
      %561 = vmatprep.subr.bf16.mxu0 0
      %562 = vmatpush1.bf16.msra.mxu0 %v548
      %563 = vmatprep.subr.bf16.mxu0 0
      %564 = vmatpush1.bf16.msra.mxu0 %v549
      %565 = vmatprep.subr.bf16.mxu0 0
      %566 = vmatpush1.bf16.msra.mxu0 0
      %567 = vmatprep.subr.bf16.mxu0 0
      %568 = vmatpush1.bf16.msra.mxu0 0
      %569 = vmatprep.subr.bf16.mxu0 0
      %570 = vmatpush1.bf16.msra.mxu0 0
      %571 = vmatprep.subr.bf16.mxu0 0
      %572 = vmatpush1.bf16.msra.mxu0 0
      %573 = vmatprep.subr.bf16.mxu0 0
      %574 = vmatpush1.bf16.msra.mxu0 0
      %575 = vmatprep.subr.bf16.mxu0 0
      %576 = vmatpush1.bf16.msra.mxu0 0
      %577 = vmatprep.subr.bf16.mxu0 0
      %578 = vmatpush1.bf16.msra.mxu0 0
      %579 = vmatprep.subr.bf16.mxu0 0
      %580 = vmatpush1.bf16.msra.mxu0 0
      %581 = vmatprep.subr.bf16.mxu0 0
      %582 = vmatpush1.bf16.msra.mxu0 0
      %583 = vmatprep.subr.bf16.mxu0 0
      %584 = vmatpush1.bf16.msra.mxu0 0
      %585 = vmatprep.subr.bf16.mxu0 0
      %586 = vmatpush1.bf16.msra.mxu0 0
      %587 = vmatprep.subr.bf16.mxu0 0
      %588 = vmatpush1.bf16.msra.mxu0 0
      %589 = vmatprep.mubr.bf16.mxu0 0
      %590 = vmatmul.mubr.bf16.gmra.mrb[0].mxu0 %v555
      %v591 = vpop.f32.mrb[0].mxu0
      %v592 = vadd.f32 %v525, %v591
      %v593 = vpop.f32.mrb[0].mxu0
      %v594 = vpop.f32.mrb[0].mxu0
      %v595 = vpop.f32.mrb[0].mxu0
      %596 = vdwg.mxu0
      %s597 = scalar_lea.vmem [#allocation2], 2
      %v598 = vld [vmem:[%s597] ss:$2 sm:$0xff]
      %v599 = vpack.c.bf16 %v598, %v598
      %s600 = scalar_lea.vmem %s3, 64
      %v601 = vld [vmem:[%s600] sm:$0xf]
      %v602 = vld [vmem:[%s600 + $0x4] sm:$0xf]
      %v603 = vld [vmem:[%s600 + $0x8] sm:$0xf]
      %v604 = vld [vmem:[%s600 + $0xc] sm:$0xf]
      %v605 = vld [vmem:[%s600 + $0x10] sm:$0xf]
      %v606 = vld [vmem:[%s600 + $0x14] sm:$0xf]
      %v607 = vld [vmem:[%s600 + $0x18] sm:$0xf]
      %v608 = vld [vmem:[%s600 + $0x1c] sm:$0xf]
      %v617 = vunpack.c.l.b16 %v601
      %v618 = vunpack.c.l.b16 %v602
      %v619 = vunpack.c.l.b16 %v603
      %v620 = vunpack.c.l.b16 %v604
      %v621 = vunpack.c.l.b16 %v605
      %v622 = vunpack.c.l.b16 %v606
      %v623 = vunpack.c.l.b16 %v607
      %v624 = vunpack.c.l.b16 %v608
      %v625 = vpack.c.b16 %v618, %v617
      %v626 = vpack.c.b16 %v620, %v619
      %v627 = vpack.c.b16 %v622, %v621
      %v628 = vpack.c.b16 %v624, %v623
      %v634 = vsel %vm438, %v599, 0
      %636 = vmatprep.subr.bf16.mxu0 0
      %637 = vmatpush1.bf16.msra.mxu0 %v625
      %638 = vmatprep.subr.bf16.mxu0 0
      %639 = vmatpush1.bf16.msra.mxu0 %v626
      %640 = vmatprep.subr.bf16.mxu0 0
      %641 = vmatpush1.bf16.msra.mxu0 %v627
      %642 = vmatprep.subr.bf16.mxu0 0
      %643 = vmatpush1.bf16.msra.mxu0 %v628
      %644 = vmatprep.subr.bf16.mxu0 0
      %645 = vmatpush1.bf16.msra.mxu0 0
      %646 = vmatprep.subr.bf16.mxu0 0
      %647 = vmatpush1.bf16.msra.mxu0 0
      %648 = vmatprep.subr.bf16.mxu0 0
      %649 = vmatpush1.bf16.msra.mxu0 0
      %650 = vmatprep.subr.bf16.mxu0 0
      %651 = vmatpush1.bf16.msra.mxu0 0
      %652 = vmatprep.subr.bf16.mxu0 0
      %653 = vmatpush1.bf16.msra.mxu0 0
      %654 = vmatprep.subr.bf16.mxu0 0
      %655 = vmatpush1.bf16.msra.mxu0 0
      %656 = vmatprep.subr.bf16.mxu0 0
      %657 = vmatpush1.bf16.msra.mxu0 0
      %658 = vmatprep.subr.bf16.mxu0 0
      %659 = vmatpush1.bf16.msra.mxu0 0
      %660 = vmatprep.subr.bf16.mxu0 0
      %661 = vmatpush1.bf16.msra.mxu0 0
      %662 = vmatprep.subr.bf16.mxu0 0
      %663 = vmatpush1.bf16.msra.mxu0 0
      %664 = vmatprep.subr.bf16.mxu0 0
      %665 = vmatpush1.bf16.msra.mxu0 0
      %666 = vmatprep.subr.bf16.mxu0 0
      %667 = vmatpush1.bf16.msra.mxu0 0
      %668 = vmatprep.mubr.bf16.mxu0 0
      %669 = vmatmul.mubr.bf16.gmra.mrb[0].mxu0 %v634
      %v670 = vpop.f32.mrb[0].mxu0
      %v671 = vadd.f32 0.0, %v670
      %v672 = vpop.f32.mrb[0].mxu0
      %v673 = vpop.f32.mrb[0].mxu0
      %v674 = vpop.f32.mrb[0].mxu0
      %675 = vdwg.mxu0
      %v676 = vadd.f32 %v592, %v671
      %v677 = vld [vmem:[%s4] sm:$0x1]
      %v679 = vlaneseq
      %v680 = vshrl.u32 %v679, 7
      %v681 = vsub.s32 0, %v680
      %v682 = vrot.slane %v677, %v681
      %v684 = vadd.f32 %v676, %v682
      %v685 = vmax.f32 %v684, 0.0
      %686 = vst.msk [vmem:[#allocation3] sm:$0x1] %vm435, 0.0
      %687 = vst.msk [vmem:[#allocation3 + $0x9] sm:$0x1] %vm435, 0.0
      %688 = vst.msk [vmem:[#allocation3 + $0x1] sm:$0xff] %vm438, %v685
      %v689 = vld [vmem:[#allocation3] sm:$0xff]
      %v690 = vld [vmem:[#allocation3 + $0x8] sm:$0x3]
      %v691 = vpack.c.bf16 %v690, %v689
      %v692 = vld [vmem:[%s5] sm:$0xf]
      %v693 = vld [vmem:[%s5 + $0x4] sm:$0xf]
      %v694 = vld [vmem:[%s5 + $0x8] sm:$0xf]
      %v695 = vld [vmem:[%s5 + $0xc] sm:$0xf]
      %v696 = vld [vmem:[%s5 + $0x10] sm:$0xf]
      %v697 = vld [vmem:[%s5 + $0x14] sm:$0xf]
      %v698 = vld [vmem:[%s5 + $0x18] sm:$0xf]
      %v699 = vld [vmem:[%s5 + $0x1c] sm:$0xf]
      %s700 = scalar_lea.vmem %s5, 32
      %v701 = vld [vmem:[%s700] sm:$0xf]
      %v702 = vld [vmem:[%s700 + $0x4] sm:$0xf]
      %v703 = vld [vmem:[%s700 + $0x8] sm:$0xf]
      %v704 = vld [vmem:[%s700 + $0xc] sm:$0xf]
      %v705 = vld [vmem:[%s700 + $0x10] sm:$0xf]
      %v706 = vld [vmem:[%s700 + $0x14] sm:$0xf]
      %v707 = vld [vmem:[%s700 + $0x18] sm:$0xf]
      %v708 = vld [vmem:[%s700 + $0x1c] sm:$0xf]
      %v710 = vshrl.u32 %v691, 16
      %v712 = vshll.u32 %v691, 16
      %v714 = vrot.slane %v712, 1
      %v715 = vor.u32 %v710, %v714
      %v724 = vunpack.c.l.b16 %v701
      %v725 = vunpack.c.l.b16 %v702
      %v726 = vunpack.c.l.b16 %v703
      %v727 = vunpack.c.l.b16 %v704
      %v728 = vunpack.c.l.b16 %v705
      %v729 = vunpack.c.l.b16 %v706
      %v730 = vunpack.c.l.b16 %v707
      %v731 = vunpack.c.l.b16 %v708
      %v732 = vpack.c.b16 %v725, %v724
      %v733 = vpack.c.b16 %v727, %v726
      %v734 = vpack.c.b16 %v729, %v728
      %v735 = vpack.c.b16 %v731, %v730
      %v741 = vsel %vm438, %v715, 0
      %743 = vmatprep.subr.bf16.mxu0 0
      %744 = vmatpush1.bf16.msra.mxu0 %v732
      %745 = vmatprep.subr.bf16.mxu0 0
      %746 = vmatpush1.bf16.msra.mxu0 %v733
      %747 = vmatprep.subr.bf16.mxu0 0
      %748 = vmatpush1.bf16.msra.mxu0 %v734
      %749 = vmatprep.subr.bf16.mxu0 0
      %750 = vmatpush1.bf16.msra.mxu0 %v735
      %751 = vmatprep.subr.bf16.mxu0 0
      %752 = vmatpush1.bf16.msra.mxu0 0
      %753 = vmatprep.subr.bf16.mxu0 0
      %754 = vmatpush1.bf16.msra.mxu0 0
      %755 = vmatprep.subr.bf16.mxu0 0
      %756 = vmatpush1.bf16.msra.mxu0 0
      %757 = vmatprep.subr.bf16.mxu0 0
      %758 = vmatpush1.bf16.msra.mxu0 0
      %759 = vmatprep.subr.bf16.mxu0 0
      %760 = vmatpush1.bf16.msra.mxu0 0
      %761 = vmatprep.subr.bf16.mxu0 0
      %762 = vmatpush1.bf16.msra.mxu0 0
      %763 = vmatprep.subr.bf16.mxu0 0
      %764 = vmatpush1.bf16.msra.mxu0 0
      %765 = vmatprep.subr.bf16.mxu0 0
      %766 = vmatpush1.bf16.msra.mxu0 0
      %767 = vmatprep.subr.bf16.mxu0 0
      %768 = vmatpush1.bf16.msra.mxu0 0
      %769 = vmatprep.subr.bf16.mxu0 0
      %770 = vmatpush1.bf16.msra.mxu0 0
      %771 = vmatprep.subr.bf16.mxu0 0
      %772 = vmatpush1.bf16.msra.mxu0 0
      %773 = vmatprep.subr.bf16.mxu0 0
      %774 = vmatpush1.bf16.msra.mxu0 0
      %775 = vmatprep.mubr.bf16.mxu0 0
      %776 = vmatmul.mubr.bf16.gmra.mrb[0].mxu0 %v741
      %v777 = vpop.f32.mrb[0].mxu0
      %v778 = vadd.f32 0.0, %v777
      %v779 = vpop.f32.mrb[0].mxu0
      %v780 = vpop.f32.mrb[0].mxu0
      %v781 = vpop.f32.mrb[0].mxu0
      %782 = vdwg.mxu0
      %v791 = vunpack.c.l.b16 %v692
      %v792 = vunpack.c.l.b16 %v693
      %v793 = vunpack.c.l.b16 %v694
      %v794 = vunpack.c.l.b16 %v695
      %v795 = vunpack.c.l.b16 %v696
      %v796 = vunpack.c.l.b16 %v697
      %v797 = vunpack.c.l.b16 %v698
      %v798 = vunpack.c.l.b16 %v699
      %v799 = vpack.c.b16 %v792, %v791
      %v800 = vpack.c.b16 %v794, %v793
      %v801 = vpack.c.b16 %v796, %v795
      %v802 = vpack.c.b16 %v798, %v797
      %v807 = vsel %vm438, %v691, 0
      %809 = vmatprep.subr.bf16.mxu0 0
      %810 = vmatpush1.bf16.msra.mxu0 %v799
      %811 = vmatprep.subr.bf16.mxu0 0
      %812 = vmatpush1.bf16.msra.mxu0 %v800
      %813 = vmatprep.subr.bf16.mxu0 0
      %814 = vmatpush1.bf16.msra.mxu0 %v801
      %815 = vmatprep.subr.bf16.mxu0 0
      %816 = vmatpush1.bf16.msra.mxu0 %v802
      %817 = vmatprep.subr.bf16.mxu0 0
      %818 = vmatpush1.bf16.msra.mxu0 0
      %819 = vmatprep.subr.bf16.mxu0 0
      %820 = vmatpush1.bf16.msra.mxu0 0
      %821 = vmatprep.subr.bf16.mxu0 0
      %822 = vmatpush1.bf16.msra.mxu0 0
      %823 = vmatprep.subr.bf16.mxu0 0
      %824 = vmatpush1.bf16.msra.mxu0 0
      %825 = vmatprep.subr.bf16.mxu0 0
      %826 = vmatpush1.bf16.msra.mxu0 0
      %827 = vmatprep.subr.bf16.mxu0 0
      %828 = vmatpush1.bf16.msra.mxu0 0
      %829 = vmatprep.subr.bf16.mxu0 0
      %830 = vmatpush1.bf16.msra.mxu0 0
      %831 = vmatprep.subr.bf16.mxu0 0
      %832 = vmatpush1.bf16.msra.mxu0 0
      %833 = vmatprep.subr.bf16.mxu0 0
      %834 = vmatpush1.bf16.msra.mxu0 0
      %835 = vmatprep.subr.bf16.mxu0 0
      %836 = vmatpush1.bf16.msra.mxu0 0
      %837 = vmatprep.subr.bf16.mxu0 0
      %838 = vmatpush1.bf16.msra.mxu0 0
      %839 = vmatprep.subr.bf16.mxu0 0
      %840 = vmatpush1.bf16.msra.mxu0 0
      %841 = vmatprep.mubr.bf16.mxu0 0
      %842 = vmatmul.mubr.bf16.gmra.mrb[0].mxu0 %v807
      %v843 = vpop.f32.mrb[0].mxu0
      %v844 = vadd.f32 %v778, %v843
      %v845 = vpop.f32.mrb[0].mxu0
      %v846 = vpop.f32.mrb[0].mxu0
      %v847 = vpop.f32.mrb[0].mxu0
      %848 = vdwg.mxu0
      %s849 = scalar_lea.vmem %s5, 64
      %v850 = vld [vmem:[%s849] sm:$0xf]
      %v851 = vld [vmem:[%s849 + $0x4] sm:$0xf]
      %v852 = vld [vmem:[%s849 + $0x8] sm:$0xf]
      %v853 = vld [vmem:[%s849 + $0xc] sm:$0xf]
      %v854 = vld [vmem:[%s849 + $0x10] sm:$0xf]
      %v855 = vld [vmem:[%s849 + $0x14] sm:$0xf]
      %v856 = vld [vmem:[%s849 + $0x18] sm:$0xf]
      %v857 = vld [vmem:[%s849 + $0x1c] sm:$0xf]
      %v859 = vrot.slane %v691, 1
      %v868 = vunpack.c.l.b16 %v850
      %v869 = vunpack.c.l.b16 %v851
      %v870 = vunpack.c.l.b16 %v852
      %v871 = vunpack.c.l.b16 %v853
      %v872 = vunpack.c.l.b16 %v854
      %v873 = vunpack.c.l.b16 %v855
      %v874 = vunpack.c.l.b16 %v856
      %v875 = vunpack.c.l.b16 %v857
      %v876 = vpack.c.b16 %v869, %v868
      %v877 = vpack.c.b16 %v871, %v870
      %v878 = vpack.c.b16 %v873, %v872
      %v879 = vpack.c.b16 %v875, %v874
      %v885 = vsel %vm438, %v859, 0
      %887 = vmatprep.subr.bf16.mxu0 0
      %888 = vmatpush1.bf16.msra.mxu0 %v876
      %889 = vmatprep.subr.bf16.mxu0 0
      %890 = vmatpush1.bf16.msra.mxu0 %v877
      %891 = vmatprep.subr.bf16.mxu0 0
      %892 = vmatpush1.bf16.msra.mxu0 %v878
      %893 = vmatprep.subr.bf16.mxu0 0
      %894 = vmatpush1.bf16.msra.mxu0 %v879
      %895 = vmatprep.subr.bf16.mxu0 0
      %896 = vmatpush1.bf16.msra.mxu0 0
      %897 = vmatprep.subr.bf16.mxu0 0
      %898 = vmatpush1.bf16.msra.mxu0 0
      %899 = vmatprep.subr.bf16.mxu0 0
      %900 = vmatpush1.bf16.msra.mxu0 0
      %901 = vmatprep.subr.bf16.mxu0 0
      %902 = vmatpush1.bf16.msra.mxu0 0
      %903 = vmatprep.subr.bf16.mxu0 0
      %904 = vmatpush1.bf16.msra.mxu0 0
      %905 = vmatprep.subr.bf16.mxu0 0
      %906 = vmatpush1.bf16.msra.mxu0 0
      %907 = vmatprep.subr.bf16.mxu0 0
      %908 = vmatpush1.bf16.msra.mxu0 0
      %909 = vmatprep.subr.bf16.mxu0 0
      %910 = vmatpush1.bf16.msra.mxu0 0
      %911 = vmatprep.subr.bf16.mxu0 0
      %912 = vmatpush1.bf16.msra.mxu0 0
      %913 = vmatprep.subr.bf16.mxu0 0
      %914 = vmatpush1.bf16.msra.mxu0 0
      %915 = vmatprep.subr.bf16.mxu0 0
      %916 = vmatpush1.bf16.msra.mxu0 0
      %917 = vmatprep.subr.bf16.mxu0 0
      %918 = vmatpush1.bf16.msra.mxu0 0
      %919 = vmatprep.mubr.bf16.mxu0 0
      %920 = vmatmul.mubr.bf16.gmra.mrb[0].mxu0 %v885
      %v921 = vpop.f32.mrb[0].mxu0
      %v922 = vadd.f32 0.0, %v921
      %v923 = vpop.f32.mrb[0].mxu0
      %v924 = vpop.f32.mrb[0].mxu0
      %v925 = vpop.f32.mrb[0].mxu0
      %926 = vdwg.mxu0
      %v927 = vadd.f32 %v844, %v922
      %v928 = vld [vmem:[%s6] sm:$0xf]
      %v929 = vld [vmem:[%s6 + $0x4] sm:$0xf]
      %v930 = vld [vmem:[%s6 + $0x8] sm:$0xf]
      %v931 = vld [vmem:[%s6 + $0xc] sm:$0xf]
      %v932 = vld [vmem:[%s6 + $0x10] sm:$0xf]
      %v933 = vld [vmem:[%s6 + $0x14] sm:$0xf]
      %v934 = vld [vmem:[%s6 + $0x18] sm:$0xf]
      %v935 = vld [vmem:[%s6 + $0x1c] sm:$0xf]
      %v944 = vunpack.c.l.b16 %v928
      %v945 = vunpack.c.l.b16 %v929
      %v946 = vunpack.c.l.b16 %v930
      %v947 = vunpack.c.l.b16 %v931
      %v948 = vunpack.c.l.b16 %v932
      %v949 = vunpack.c.l.b16 %v933
      %v950 = vunpack.c.l.b16 %v934
      %v951 = vunpack.c.l.b16 %v935
      %v952 = vpack.c.b16 %v945, %v944
      %v953 = vpack.c.b16 %v947, %v946
      %v954 = vpack.c.b16 %v949, %v948
      %v955 = vpack.c.b16 %v951, %v950
      %960 = vmatprep.subr.bf16.mxu0 0
      %961 = vmatpush1.bf16.msra.mxu0 %v952
      %962 = vmatprep.subr.bf16.mxu0 0
      %963 = vmatpush1.bf16.msra.mxu0 %v953
      %964 = vmatprep.subr.bf16.mxu0 0
      %965 = vmatpush1.bf16.msra.mxu0 %v954
      %966 = vmatprep.subr.bf16.mxu0 0
      %967 = vmatpush1.bf16.msra.mxu0 %v955
      %968 = vmatprep.subr.bf16.mxu0 0
      %969 = vmatpush1.bf16.msra.mxu0 0
      %970 = vmatprep.subr.bf16.mxu0 0
      %971 = vmatpush1.bf16.msra.mxu0 0
      %972 = vmatprep.subr.bf16.mxu0 0
      %973 = vmatpush1.bf16.msra.mxu0 0
      %974 = vmatprep.subr.bf16.mxu0 0
      %975 = vmatpush1.bf16.msra.mxu0 0
      %976 = vmatprep.subr.bf16.mxu0 0
      %977 = vmatpush1.bf16.msra.mxu0 0
      %978 = vmatprep.subr.bf16.mxu0 0
      %979 = vmatpush1.bf16.msra.mxu0 0
      %980 = vmatprep.subr.bf16.mxu0 0
      %981 = vmatpush1.bf16.msra.mxu0 0
      %982 = vmatprep.subr.bf16.mxu0 0
      %983 = vmatpush1.bf16.msra.mxu0 0
      %984 = vmatprep.subr.bf16.mxu0 0
      %985 = vmatpush1.bf16.msra.mxu0 0
      %986 = vmatprep.subr.bf16.mxu0 0
      %987 = vmatpush1.bf16.msra.mxu0 0
      %988 = vmatprep.subr.bf16.mxu0 0
      %989 = vmatpush1.bf16.msra.mxu0 0
      %990 = vmatprep.subr.bf16.mxu0 0
      %991 = vmatpush1.bf16.msra.mxu0 0
      %992 = vmatprep.mubr.bf16.mxu0 0
      %993 = vmatmul.mubr.bf16.gmra.mrb[0].mxu0 %v488
      %v994 = vpop.f32.mrb[0].mxu0
      %v995 = vadd.f32 0.0, %v994
      %v996 = vpop.f32.mrb[0].mxu0
      %v997 = vpop.f32.mrb[0].mxu0
      %v998 = vpop.f32.mrb[0].mxu0
      %999 = vdwg.mxu0
      %v1000 = vadd.f32 %v927, %v995
      %v1001 = vld [vmem:[%s7] sm:$0x1]
      %v1003 = vlaneseq
      %v1004 = vshrl.u32 %v1003, 7
      %v1005 = vsub.s32 0, %v1004
      %v1006 = vrot.slane %v1001, %v1005
      %v1008 = vmul.f32 %v1000, %v1006
      %v1009 = vld [vmem:[%s8] sm:$0x1]
      %v1011 = vlaneseq
      %v1012 = vshrl.u32 %v1011, 7
      %v1013 = vsub.s32 0, %v1012
      %v1014 = vrot.slane %v1009, %v1013
      %v1016 = vadd.f32 %v1008, %v1014
      %v1017 = vmax.f32 %v1016, 0.0
      %1018 = vst.msk [vmem:[#allocation4] sm:$0x1] %vm435, 0.0
      %1019 = vst.msk [vmem:[#allocation4 + $0x9] sm:$0x1] %vm435, 0.0
      %1020 = vst.msk [vmem:[#allocation4 + $0x1] sm:$0xff] %vm438, %v1017
      %v1021 = vld [vmem:[#allocation4] sm:$0xff]
      %v1022 = vld [vmem:[#allocation4 + $0x8] sm:$0x3]
      %v1023 = vpack.c.bf16 %v1022, %v1021
      %v1024 = vld [vmem:[%s9] sm:$0xf]
      %v1025 = vld [vmem:[%s9 + $0x4] sm:$0xf]
      %v1026 = vld [vmem:[%s9 + $0x8] sm:$0xf]
      %v1027 = vld [vmem:[%s9 + $0xc] sm:$0xf]
      %v1028 = vld [vmem:[%s9 + $0x10] sm:$0xf]
      %v1029 = vld [vmem:[%s9 + $0x14] sm:$0xf]
      %v1030 = vld [vmem:[%s9 + $0x18] sm:$0xf]
      %v1031 = vld [vmem:[%s9 + $0x1c] sm:$0xf]
      %s1032 = scalar_lea.vmem %s9, 32
      %v1033 = vld [vmem:[%s1032] sm:$0xf]
      %v1034 = vld [vmem:[%s1032 + $0x4] sm:$0xf]
      %v1035 = vld [vmem:[%s1032 + $0x8] sm:$0xf]
      %v1036 = vld [vmem:[%s1032 + $0xc] sm:$0xf]
      %v1037 = vld [vmem:[%s1032 + $0x10] sm:$0xf]
      %v1038 = vld [vmem:[%s1032 + $0x14] sm:$0xf]
      %v1039 = vld [vmem:[%s1032 + $0x18] sm:$0xf]
      %v1040 = vld [vmem:[%s1032 + $0x1c] sm:$0xf]
      %v1042 = vshrl.u32 %v1023, 16
      %v1044 = vshll.u32 %v1023, 16
      %v1046 = vrot.slane %v1044, 1
      %v1047 = vor.u32 %v1042, %v1046
      %v1056 = vunpack.c.l.b16 %v1033
      %v1057 = vunpack.c.l.b16 %v1034
      %v1058 = vunpack.c.l.b16 %v1035
      %v1059 = vunpack.c.l.b16 %v1036
      %v1060 = vunpack.c.l.b16 %v1037
      %v1061 = vunpack.c.l.b16 %v1038
      %v1062 = vunpack.c.l.b16 %v1039
      %v1063 = vunpack.c.l.b16 %v1040
      %v1064 = vpack.c.b16 %v1057, %v1056
      %v1065 = vpack.c.b16 %v1059, %v1058
      %v1066 = vpack.c.b16 %v1061, %v1060
      %v1067 = vpack.c.b16 %v1063, %v1062
      %v1073 = vsel %vm438, %v1047, 0
      %1075 = vmatprep.subr.bf16.mxu0 0
      %1076 = vmatpush1.bf16.msra.mxu0 %v1064
      %1077 = vmatprep.subr.bf16.mxu0 0
      %1078 = vmatpush1.bf16.msra.mxu0 %v1065
      %1079 = vmatprep.subr.bf16.mxu0 0
      %1080 = vmatpush1.bf16.msra.mxu0 %v1066
      %1081 = vmatprep.subr.bf16.mxu0 0
      %1082 = vmatpush1.bf16.msra.mxu0 %v1067
      %1083 = vmatprep.subr.bf16.mxu0 0
      %1084 = vmatpush1.bf16.msra.mxu0 0
      %1085 = vmatprep.subr.bf16.mxu0 0
      %1086 = vmatpush1.bf16.msra.mxu0 0
      %1087 = vmatprep.subr.bf16.mxu0 0
      %1088 = vmatpush1.bf16.msra.mxu0 0
      %1089 = vmatprep.subr.bf16.mxu0 0
      %1090 = vmatpush1.bf16.msra.mxu0 0
      %1091 = vmatprep.subr.bf16.mxu0 0
      %1092 = vmatpush1.bf16.msra.mxu0 0
      %1093 = vmatprep.subr.bf16.mxu0 0
      %1094 = vmatpush1.bf16.msra.mxu0 0
      %1095 = vmatprep.subr.bf16.mxu0 0
      %1096 = vmatpush1.bf16.msra.mxu0 0
      %1097 = vmatprep.subr.bf16.mxu0 0
      %1098 = vmatpush1.bf16.msra.mxu0 0
      %1099 = vmatprep.subr.bf16.mxu0 0
      %1100 = vmatpush1.bf16.msra.mxu0 0
      %1101 = vmatprep.subr.bf16.mxu0 0
      %1102 = vmatpush1.bf16.msra.mxu0 0
      %1103 = vmatprep.subr.bf16.mxu0 0
      %1104 = vmatpush1.bf16.msra.mxu0 0
      %1105 = vmatprep.subr.bf16.mxu0 0
      %1106 = vmatpush1.bf16.msra.mxu0 0
      %1107 = vmatprep.mubr.bf16.mxu0 0
      %1108 = vmatmul.mubr.bf16.gmra.mrb[0].mxu0 %v1073
      %v1109 = vpop.f32.mrb[0].mxu0
      %v1110 = vadd.f32 0.0, %v1109
      %v1111 = vpop.f32.mrb[0].mxu0
      %v1112 = vpop.f32.mrb[0].mxu0
      %v1113 = vpop.f32.mrb[0].mxu0
      %1114 = vdwg.mxu0
      %v1123 = vunpack.c.l.b16 %v1024
      %v1124 = vunpack.c.l.b16 %v1025
      %v1125 = vunpack.c.l.b16 %v1026
      %v1126 = vunpack.c.l.b16 %v1027
      %v1127 = vunpack.c.l.b16 %v1028
      %v1128 = vunpack.c.l.b16 %v1029
      %v1129 = vunpack.c.l.b16 %v1030
      %v1130 = vunpack.c.l.b16 %v1031
      %v1131 = vpack.c.b16 %v1124, %v1123
      %v1132 = vpack.c.b16 %v1126, %v1125
      %v1133 = vpack.c.b16 %v1128, %v1127
      %v1134 = vpack.c.b16 %v1130, %v1129
      %v1139 = vsel %vm438, %v1023, 0
      %1141 = vmatprep.subr.bf16.mxu0 0
      %1142 = vmatpush1.bf16.msra.mxu0 %v1131
      %1143 = vmatprep.subr.bf16.mxu0 0
      %1144 = vmatpush1.bf16.msra.mxu0 %v1132
      %1145 = vmatprep.subr.bf16.mxu0 0
      %1146 = vmatpush1.bf16.msra.mxu0 %v1133
      %1147 = vmatprep.subr.bf16.mxu0 0
      %1148 = vmatpush1.bf16.msra.mxu0 %v1134
      %1149 = vmatprep.subr.bf16.mxu0 0
      %1150 = vmatpush1.bf16.msra.mxu0 0
      %1151 = vmatprep.subr.bf16.mxu0 0
      %1152 = vmatpush1.bf16.msra.mxu0 0
      %1153 = vmatprep.subr.bf16.mxu0 0
      %1154 = vmatpush1.bf16.msra.mxu0 0
      %1155 = vmatprep.subr.bf16.mxu0 0
      %1156 = vmatpush1.bf16.msra.mxu0 0
      %1157 = vmatprep.subr.bf16.mxu0 0
      %1158 = vmatpush1.bf16.msra.mxu0 0
      %1159 = vmatprep.subr.bf16.mxu0 0
      %1160 = vmatpush1.bf16.msra.mxu0 0
      %1161 = vmatprep.subr.bf16.mxu0 0
      %1162 = vmatpush1.bf16.msra.mxu0 0
      %1163 = vmatprep.subr.bf16.mxu0 0
      %1164 = vmatpush1.bf16.msra.mxu0 0
      %1165 = vmatprep.subr.bf16.mxu0 0
      %1166 = vmatpush1.bf16.msra.mxu0 0
      %1167 = vmatprep.subr.bf16.mxu0 0
      %1168 = vmatpush1.bf16.msra.mxu0 0
      %1169 = vmatprep.subr.bf16.mxu0 0
      %1170 = vmatpush1.bf16.msra.mxu0 0
      %1171 = vmatprep.subr.bf16.mxu0 0
      %1172 = vmatpush1.bf16.msra.mxu0 0
      %1173 = vmatprep.mubr.bf16.mxu0 0
      %1174 = vmatmul.mubr.bf16.gmra.mrb[0].mxu0 %v1139
      %v1175 = vpop.f32.mrb[0].mxu0
      %v1176 = vadd.f32 %v1110, %v1175
      %v1177 = vpop.f32.mrb[0].mxu0
      %v1178 = vpop.f32.mrb[0].mxu0
      %v1179 = vpop.f32.mrb[0].mxu0
      %1180 = vdwg.mxu0
      %s1181 = scalar_lea.vmem %s9, 64
      %v1182 = vld [vmem:[%s1181] sm:$0xf]
      %v1183 = vld [vmem:[%s1181 + $0x4] sm:$0xf]
      %v1184 = vld [vmem:[%s1181 + $0x8] sm:$0xf]
      %v1185 = vld [vmem:[%s1181 + $0xc] sm:$0xf]
      %v1186 = vld [vmem:[%s1181 + $0x10] sm:$0xf]
      %v1187 = vld [vmem:[%s1181 + $0x14] sm:$0xf]
      %v1188 = vld [vmem:[%s1181 + $0x18] sm:$0xf]
      %v1189 = vld [vmem:[%s1181 + $0x1c] sm:$0xf]
      %v1191 = vrot.slane %v1023, 1
      %v1200 = vunpack.c.l.b16 %v1182
      %v1201 = vunpack.c.l.b16 %v1183
      %v1202 = vunpack.c.l.b16 %v1184
      %v1203 = vunpack.c.l.b16 %v1185
      %v1204 = vunpack.c.l.b16 %v1186
      %v1205 = vunpack.c.l.b16 %v1187
      %v1206 = vunpack.c.l.b16 %v1188
      %v1207 = vunpack.c.l.b16 %v1189
      %v1208 = vpack.c.b16 %v1201, %v1200
      %v1209 = vpack.c.b16 %v1203, %v1202
      %v1210 = vpack.c.b16 %v1205, %v1204
      %v1211 = vpack.c.b16 %v1207, %v1206
      %v1217 = vsel %vm438, %v1191, 0
      %1219 = vmatprep.subr.bf16.mxu0 0
      %1220 = vmatpush1.bf16.msra.mxu0 %v1208
      %1221 = vmatprep.subr.bf16.mxu0 0
      %1222 = vmatpush1.bf16.msra.mxu0 %v1209
      %1223 = vmatprep.subr.bf16.mxu0 0
      %1224 = vmatpush1.bf16.msra.mxu0 %v1210
      %1225 = vmatprep.subr.bf16.mxu0 0
      %1226 = vmatpush1.bf16.msra.mxu0 %v1211
      %1227 = vmatprep.subr.bf16.mxu0 0
      %1228 = vmatpush1.bf16.msra.mxu0 0
      %1229 = vmatprep.subr.bf16.mxu0 0
      %1230 = vmatpush1.bf16.msra.mxu0 0
      %1231 = vmatprep.subr.bf16.mxu0 0
      %1232 = vmatpush1.bf16.msra.mxu0 0
      %1233 = vmatprep.subr.bf16.mxu0 0
      %1234 = vmatpush1.bf16.msra.mxu0 0
      %1235 = vmatprep.subr.bf16.mxu0 0
      %1236 = vmatpush1.bf16.msra.mxu0 0
      %1237 = vmatprep.subr.bf16.mxu0 0
      %1238 = vmatpush1.bf16.msra.mxu0 0
      %1239 = vmatprep.subr.bf16.mxu0 0
      %1240 = vmatpush1.bf16.msra.mxu0 0
      %1241 = vmatprep.subr.bf16.mxu0 0
      %1242 = vmatpush1.bf16.msra.mxu0 0
      %1243 = vmatprep.subr.bf16.mxu0 0
      %1244 = vmatpush1.bf16.msra.mxu0 0
      %1245 = vmatprep.subr.bf16.mxu0 0
      %1246 = vmatpush1.bf16.msra.mxu0 0
      %1247 = vmatprep.subr.bf16.mxu0 0
      %1248 = vmatpush1.bf16.msra.mxu0 0
      %1249 = vmatprep.subr.bf16.mxu0 0
      %1250 = vmatpush1.bf16.msra.mxu0 0
      %1251 = vmatprep.mubr.bf16.mxu0 0
      %1252 = vmatmul.mubr.bf16.gmra.mrb[0].mxu0 %v1217
      %v1253 = vpop.f32.mrb[0].mxu0
      %v1254 = vadd.f32 0.0, %v1253
      %v1255 = vpop.f32.mrb[0].mxu0
      %v1256 = vpop.f32.mrb[0].mxu0
      %v1257 = vpop.f32.mrb[0].mxu0
      %1258 = vdwg.mxu0
      %v1259 = vadd.f32 %v1176, %v1254
      %v1260 = vld [vmem:[%s10] sm:$0x1]
      %v1262 = vlaneseq
      %v1263 = vshrl.u32 %v1262, 7
      %v1264 = vsub.s32 0, %v1263
      %v1265 = vrot.slane %v1260, %v1264
      %v1267 = vadd.f32 %v1259, %v1265
      %v1268 = vmax.f32 %v1267, 0.0
      %1269 = vst.msk [vmem:[#allocation5] sm:$0x1] %vm435, 0.0
      %1270 = vst.msk [vmem:[#allocation5 + $0x9] sm:$0x1] %vm435, 0.0
      %1271 = vst.msk [vmem:[#allocation5 + $0x1] sm:$0xff] %vm438, %v1268
      %v1272 = vld [vmem:[#allocation5] sm:$0xff]
      %v1273 = vld [vmem:[#allocation5 + $0x8] sm:$0x3]
      %v1274 = vpack.c.bf16 %v1273, %v1272
      %v1275 = vld [vmem:[%s11] sm:$0xf]
      %v1276 = vld [vmem:[%s11 + $0x4] sm:$0xf]
      %v1277 = vld [vmem:[%s11 + $0x8] sm:$0xf]
      %v1278 = vld [vmem:[%s11 + $0xc] sm:$0xf]
      %v1279 = vld [vmem:[%s11 + $0x10] sm:$0xf]
      %v1280 = vld [vmem:[%s11 + $0x14] sm:$0xf]
      %v1281 = vld [vmem:[%s11 + $0x18] sm:$0xf]
      %v1282 = vld [vmem:[%s11 + $0x1c] sm:$0xf]
      %s1283 = scalar_lea.vmem %s11, 32
      %v1284 = vld [vmem:[%s1283] sm:$0xf]
      %v1285 = vld [vmem:[%s1283 + $0x4] sm:$0xf]
      %v1286 = vld [vmem:[%s1283 + $0x8] sm:$0xf]
      %v1287 = vld [vmem:[%s1283 + $0xc] sm:$0xf]
      %v1288 = vld [vmem:[%s1283 + $0x10] sm:$0xf]
      %v1289 = vld [vmem:[%s1283 + $0x14] sm:$0xf]
      %v1290 = vld [vmem:[%s1283 + $0x18] sm:$0xf]
      %v1291 = vld [vmem:[%s1283 + $0x1c] sm:$0xf]
      %v1293 = vshrl.u32 %v1274, 16
      %v1295 = vshll.u32 %v1274, 16
      %v1297 = vrot.slane %v1295, 1
      %v1298 = vor.u32 %v1293, %v1297
      %v1307 = vunpack.c.l.b16 %v1284
      %v1308 = vunpack.c.l.b16 %v1285
      %v1309 = vunpack.c.l.b16 %v1286
      %v1310 = vunpack.c.l.b16 %v1287
      %v1311 = vunpack.c.l.b16 %v1288
      %v1312 = vunpack.c.l.b16 %v1289
      %v1313 = vunpack.c.l.b16 %v1290
      %v1314 = vunpack.c.l.b16 %v1291
      %v1315 = vpack.c.b16 %v1308, %v1307
      %v1316 = vpack.c.b16 %v1310, %v1309
      %v1317 = vpack.c.b16 %v1312, %v1311
      %v1318 = vpack.c.b16 %v1314, %v1313
      %v1324 = vsel %vm438, %v1298, 0
      %1326 = vmatprep.subr.bf16.mxu0 0
      %1327 = vmatpush1.bf16.msra.mxu0 %v1315
      %1328 = vmatprep.subr.bf16.mxu0 0
      %1329 = vmatpush1.bf16.msra.mxu0 %v1316
      %1330 = vmatprep.subr.bf16.mxu0 0
      %1331 = vmatpush1.bf16.msra.mxu0 %v1317
      %1332 = vmatprep.subr.bf16.mxu0 0
      %1333 = vmatpush1.bf16.msra.mxu0 %v1318
      %1334 = vmatprep.subr.bf16.mxu0 0
      %1335 = vmatpush1.bf16.msra.mxu0 0
      %1336 = vmatprep.subr.bf16.mxu0 0
      %1337 = vmatpush1.bf16.msra.mxu0 0
      %1338 = vmatprep.subr.bf16.mxu0 0
      %1339 = vmatpush1.bf16.msra.mxu0 0
      %1340 = vmatprep.subr.bf16.mxu0 0
      %1341 = vmatpush1.bf16.msra.mxu0 0
      %1342 = vmatprep.subr.bf16.mxu0 0
      %1343 = vmatpush1.bf16.msra.mxu0 0
      %1344 = vmatprep.subr.bf16.mxu0 0
      %1345 = vmatpush1.bf16.msra.mxu0 0
      %1346 = vmatprep.subr.bf16.mxu0 0
      %1347 = vmatpush1.bf16.msra.mxu0 0
      %1348 = vmatprep.subr.bf16.mxu0 0
      %1349 = vmatpush1.bf16.msra.mxu0 0
      %1350 = vmatprep.subr.bf16.mxu0 0
      %1351 = vmatpush1.bf16.msra.mxu0 0
      %1352 = vmatprep.subr.bf16.mxu0 0
      %1353 = vmatpush1.bf16.msra.mxu0 0
      %1354 = vmatprep.subr.bf16.mxu0 0
      %1355 = vmatpush1.bf16.msra.mxu0 0
      %1356 = vmatprep.subr.bf16.mxu0 0
      %1357 = vmatpush1.bf16.msra.mxu0 0
      %1358 = vmatprep.mubr.bf16.mxu0 0
      %1359 = vmatmul.mubr.bf16.gmra.mrb[0].mxu0 %v1324
      %v1360 = vpop.f32.mrb[0].mxu0
      %v1361 = vadd.f32 0.0, %v1360
      %v1362 = vpop.f32.mrb[0].mxu0
      %v1363 = vpop.f32.mrb[0].mxu0
      %v1364 = vpop.f32.mrb[0].mxu0
      %1365 = vdwg.mxu0
      %v1374 = vunpack.c.l.b16 %v1275
      %v1375 = vunpack.c.l.b16 %v1276
      %v1376 = vunpack.c.l.b16 %v1277
      %v1377 = vunpack.c.l.b16 %v1278
      %v1378 = vunpack.c.l.b16 %v1279
      %v1379 = vunpack.c.l.b16 %v1280
      %v1380 = vunpack.c.l.b16 %v1281
      %v1381 = vunpack.c.l.b16 %v1282
      %v1382 = vpack.c.b16 %v1375, %v1374
      %v1383 = vpack.c.b16 %v1377, %v1376
      %v1384 = vpack.c.b16 %v1379, %v1378
      %v1385 = vpack.c.b16 %v1381, %v1380
      %v1390 = vsel %vm438, %v1274, 0
      %1392 = vmatprep.subr.bf16.mxu0 0
      %1393 = vmatpush1.bf16.msra.mxu0 %v1382
      %1394 = vmatprep.subr.bf16.mxu0 0
      %1395 = vmatpush1.bf16.msra.mxu0 %v1383
      %1396 = vmatprep.subr.bf16.mxu0 0
      %1397 = vmatpush1.bf16.msra.mxu0 %v1384
      %1398 = vmatprep.subr.bf16.mxu0 0
      %1399 = vmatpush1.bf16.msra.mxu0 %v1385
      %1400 = vmatprep.subr.bf16.mxu0 0
      %1401 = vmatpush1.bf16.msra.mxu0 0
      %1402 = vmatprep.subr.bf16.mxu0 0
      %1403 = vmatpush1.bf16.msra.mxu0 0
      %1404 = vmatprep.subr.bf16.mxu0 0
      %1405 = vmatpush1.bf16.msra.mxu0 0
      %1406 = vmatprep.subr.bf16.mxu0 0
      %1407 = vmatpush1.bf16.msra.mxu0 0
      %1408 = vmatprep.subr.bf16.mxu0 0
      %1409 = vmatpush1.bf16.msra.mxu0 0
      %1410 = vmatprep.subr.bf16.mxu0 0
      %1411 = vmatpush1.bf16.msra.mxu0 0
      %1412 = vmatprep.subr.bf16.mxu0 0
      %1413 = vmatpush1.bf16.msra.mxu0 0
      %1414 = vmatprep.subr.bf16.mxu0 0
      %1415 = vmatpush1.bf16.msra.mxu0 0
      %1416 = vmatprep.subr.bf16.mxu0 0
      %1417 = vmatpush1.bf16.msra.mxu0 0
      %1418 = vmatprep.subr.bf16.mxu0 0
      %1419 = vmatpush1.bf16.msra.mxu0 0
      %1420 = vmatprep.subr.bf16.mxu0 0
      %1421 = vmatpush1.bf16.msra.mxu0 0
      %1422 = vmatprep.subr.bf16.mxu0 0
      %1423 = vmatpush1.bf16.msra.mxu0 0
      %1424 = vmatprep.mubr.bf16.mxu0 0
      %1425 = vmatmul.mubr.bf16.gmra.mrb[0].mxu0 %v1390
      %v1426 = vpop.f32.mrb[0].mxu0
      %v1427 = vadd.f32 %v1361, %v1426
      %v1428 = vpop.f32.mrb[0].mxu0
      %v1429 = vpop.f32.mrb[0].mxu0
      %v1430 = vpop.f32.mrb[0].mxu0
      %1431 = vdwg.mxu0
      %s1432 = scalar_lea.vmem %s11, 64
      %v1433 = vld [vmem:[%s1432] sm:$0xf]
      %v1434 = vld [vmem:[%s1432 + $0x4] sm:$0xf]
      %v1435 = vld [vmem:[%s1432 + $0x8] sm:$0xf]
      %v1436 = vld [vmem:[%s1432 + $0xc] sm:$0xf]
      %v1437 = vld [vmem:[%s1432 + $0x10] sm:$0xf]
      %v1438 = vld [vmem:[%s1432 + $0x14] sm:$0xf]
      %v1439 = vld [vmem:[%s1432 + $0x18] sm:$0xf]
      %v1440 = vld [vmem:[%s1432 + $0x1c] sm:$0xf]
      %v1442 = vrot.slane %v1274, 1
      %v1451 = vunpack.c.l.b16 %v1433
      %v1452 = vunpack.c.l.b16 %v1434
      %v1453 = vunpack.c.l.b16 %v1435
      %v1454 = vunpack.c.l.b16 %v1436
      %v1455 = vunpack.c.l.b16 %v1437
      %v1456 = vunpack.c.l.b16 %v1438
      %v1457 = vunpack.c.l.b16 %v1439
      %v1458 = vunpack.c.l.b16 %v1440
      %v1459 = vpack.c.b16 %v1452, %v1451
      %v1460 = vpack.c.b16 %v1454, %v1453
      %v1461 = vpack.c.b16 %v1456, %v1455
      %v1462 = vpack.c.b16 %v1458, %v1457
      %v1468 = vsel %vm438, %v1442, 0
      %1470 = vmatprep.subr.bf16.mxu0 0
      %1471 = vmatpush1.bf16.msra.mxu0 %v1459
      %1472 = vmatprep.subr.bf16.mxu0 0
      %1473 = vmatpush1.bf16.msra.mxu0 %v1460
      %1474 = vmatprep.subr.bf16.mxu0 0
      %1475 = vmatpush1.bf16.msra.mxu0 %v1461
      %1476 = vmatprep.subr.bf16.mxu0 0
      %1477 = vmatpush1.bf16.msra.mxu0 %v1462
      %1478 = vmatprep.subr.bf16.mxu0 0
      %1479 = vmatpush1.bf16.msra.mxu0 0
      %1480 = vmatprep.subr.bf16.mxu0 0
      %1481 = vmatpush1.bf16.msra.mxu0 0
      %1482 = vmatprep.subr.bf16.mxu0 0
      %1483 = vmatpush1.bf16.msra.mxu0 0
      %1484 = vmatprep.subr.bf16.mxu0 0
      %1485 = vmatpush1.bf16.msra.mxu0 0
      %1486 = vmatprep.subr.bf16.mxu0 0
      %1487 = vmatpush1.bf16.msra.mxu0 0
      %1488 = vmatprep.subr.bf16.mxu0 0
      %1489 = vmatpush1.bf16.msra.mxu0 0
      %1490 = vmatprep.subr.bf16.mxu0 0
      %1491 = vmatpush1.bf16.msra.mxu0 0
      %1492 = vmatprep.subr.bf16.mxu0 0
      %1493 = vmatpush1.bf16.msra.mxu0 0
      %1494 = vmatprep.subr.bf16.mxu0 0
      %1495 = vmatpush1.bf16.msra.mxu0 0
      %1496 = vmatprep.subr.bf16.mxu0 0
      %1497 = vmatpush1.bf16.msra.mxu0 0
      %1498 = vmatprep.subr.bf16.mxu0 0
      %1499 = vmatpush1.bf16.msra.mxu0 0
      %1500 = vmatprep.subr.bf16.mxu0 0
      %1501 = vmatpush1.bf16.msra.mxu0 0
      %1502 = vmatprep.mubr.bf16.mxu0 0
      %1503 = vmatmul.mubr.bf16.gmra.mrb[0].mxu0 %v1468
      %v1504 = vpop.f32.mrb[0].mxu0
      %v1505 = vadd.f32 0.0, %v1504
      %v1506 = vpop.f32.mrb[0].mxu0
      %v1507 = vpop.f32.mrb[0].mxu0
      %v1508 = vpop.f32.mrb[0].mxu0
      %1509 = vdwg.mxu0
      %v1510 = vadd.f32 %v1427, %v1505
      %v1511 = vadd.f32 %v1510, %v1000
      %1512 = vst.msk [vmem:[%s411] sm:$0xff] %vm438, %v1511
      %p1513 = scmp.lt.s32.totalorder %s23, 1
      %s1514 = scalar_select %p1513, %s23, 1
      %s1515 = smul.addr %s1514, 8
      %s1516 = scalar_lea.vmem %s12, %s1515
      // Predicated region
      $region69: #{_lambda_.1} parent=67 // pred_check
        %p1517 = pneg %p298
      $region70: #{_lambda_.1} parent=67 // pred_check_branch
        %1519 = sbr.rel (%p1517) target = $region72
      $region71: #{_lambda_.1} parent=67 // pred_region
        _
      $region72: #{_lambda_.1} parent=67 // pred_fallthru
        _
    $region68: #{_lambda_.1} parent=5 // pred_fallthru
      _
    %p1520 = scmp.le.s32.totalorder 2, %s18
    // Predicated region
    $region73: #{_lambda_.1} parent=5 // pred_check
      %p1521 = pneg %p1520
    $region74: #{_lambda_.1} parent=5 // pred_check_branch
      %1523 = sbr.rel (%p1521) target = $region76
    $region75: #{_lambda_.1} parent=5 // pred_region
      %s1524 = ssub.s32 %s18, 2
      // Predicated region
      $region77: #{_lambda_.1} parent=75 // pred_check
        %p1525 = pneg %p304
      $region78: #{_lambda_.1} parent=75 // pred_check_branch
        %1527 = sbr.rel (%p1525) target = $region80
      $region79: #{_lambda_.1} parent=75 // pred_region
        %p1528 = scmp.lt.s32.totalorder %s24, 1
        %s1529 = scalar_select %p1528, %s24, 1
        %s1530 = smul.addr %s1529, 8
        %s1531 = scalar_lea.vmem %s12, %s1530
      $region80: #{_lambda_.1} parent=75 // pred_fallthru
        _
    $region76: #{_lambda_.1} parent=5 // pred_fallthru
      _
  $region6: #{_lambda_.1} parent=0 // loop_footer
    %s22 = sadd.s32 1, %s18
  $region7: #{_lambda_.1} parent=0 // loop_footer_branch
    %17 = sbr.rel target = $region3
  $region8: #{_lambda_.1} parent=0 // loop_exit
    _

</llo_original>
